<compile_context>
chip_gen: v5e
topology: v5e:2x2
jax: 0.10.0
libtpu: 0.0.40
codegen_flags: <defaults>
</compile_context>

<pallas_src>
import functools

import jax
import jax.numpy as jnp
from jax.experimental import pallas as pl
from jax.experimental.pallas import tpu as pltpu


def _round_up(x, m):
    return ((x + m - 1) // m) * m


# ---------------------------------------------------------------------------
# Kernel 1: fused (X @ W + b), lane-dense (N padded to 128) output.
# Used once per layer for BOTH directions' LSTM input projections (N = 8H).
# ---------------------------------------------------------------------------
def _matmul_bias_kernel(x_ref, w_ref, b_ref, o_ref):
    acc = jnp.dot(x_ref[...], w_ref[...], preferred_element_type=jnp.float32)
    o_ref[...] = (acc + b_ref[...]).astype(o_ref.dtype)


def matmul_bias(x, w, b, *, tm_cap=512, compute_dtype=jnp.bfloat16):
    """x:(M,K) @ w:(K,N) + b:(1,N) -> (M,N) float32.

    w / b are expected pre-transposed / pre-cast by prepare_params; the pad
    branch below is a trace-time no-op when N is already a multiple of 128.
    """
    M, K = x.shape
    N = w.shape[1]
    Np = _round_up(N, 128)                      # lane-dense output columns
    if Np != N:
        w = jnp.pad(w, ((0, 0), (0, Np - N)))
        b = jnp.pad(b, ((0, 0), (0, Np - N)))
    # Aim for >=2 M blocks (keeps both v7x TensorCores busy) while keeping
    # (tm,K) + (K,Np) + (tm,Np) with double-buffering well inside the scoped
    # VMEM budget on all generations.
    tm = max(8, min(tm_cap, _round_up(-(-M // 2), 8)))
    Mp = _round_up(M, tm)
    if Mp != M:
        x = jnp.pad(x, ((0, Mp - M), (0, 0)))
    out = pl.pallas_call(
        _matmul_bias_kernel,
        out_shape=jax.ShapeDtypeStruct((Mp, Np), jnp.float32),
        grid=(Mp // tm,),
        in_specs=[
            pl.BlockSpec((tm, K), lambda i: (i, 0)),
            pl.BlockSpec((K, Np), lambda i: (0, 0)),
            pl.BlockSpec((1, Np), lambda i: (0, 0)),
        ],
        out_specs=pl.BlockSpec((tm, Np), lambda i: (i, 0)),
        compiler_params=pltpu.CompilerParams(
            dimension_semantics=("parallel",)),
    )(x.astype(compute_dtype), w.astype(compute_dtype), b.astype(jnp.float32))
    return out[:M, :N]


# ---------------------------------------------------------------------------
# Kernel 2: fused bidirectional LSTM recurrence.
# Single grid step; lax.fori_loop over time inside the kernel; h/c carried as
# loop values; backward direction handled via in-kernel reversed indices; one
# block-diagonal recurrent matmul (bf16 inputs, f32 accumulate) per step.
# ---------------------------------------------------------------------------
def _bilstm_kernel(gx_ref, whh_ref, h_out_ref, *, hidden, num_dirs, seq_len,
                   batch):
    H = hidden
    G = 4 * H

    def gate_update(g4, c_d):
        # TODO(synk): for H not a multiple of 128 these H-wide lane slices
        # lower to in-vreg shuffles; negligible at these sizes.
        i = jax.nn.sigmoid(g4[:, 0 * H:1 * H])
        f = jax.nn.sigmoid(g4[:, 1 * H:2 * H])
        g = jnp.tanh(g4[:, 2 * H:3 * H])
        o = jax.nn.sigmoid(g4[:, 3 * H:4 * H])
        c_new = f * c_d + i * g
        h_new = o * jnp.tanh(c_new)
        return h_new, c_new

    def step(s, carry):
        h, c = carry                                   # (B, num_dirs*H) f32
        # One block-diagonal MXU matmul serves both directions.
        rec = jnp.dot(h.astype(jnp.bfloat16), whh_ref[...],
                      preferred_element_type=jnp.float32)  # (B, num_dirs*4H)
        # forward direction: time index s
        g_f = gx_ref[s, :, 0:G] + rec[:, 0:G]
        h_f, c_f = gate_update(g_f, c[:, 0:H])
        h_out_ref[s, :, 0:H] = h_f
        if num_dirs == 2:
            sb = seq_len - 1 - s                       # in-kernel reversal
            g_b = gx_ref[sb, :, G:2 * G] + rec[:, G:2 * G]
            h_b, c_b = gate_update(g_b, c[:, H:2 * H])
            h_out_ref[sb, :, H:2 * H] = h_b
            h_new = jnp.concatenate([h_f, h_b], axis=-1)
            c_new = jnp.concatenate([c_f, c_b], axis=-1)
        else:
            h_new, c_new = h_f, c_f
        return h_new, c_new

    zeros = jnp.zeros((batch, num_dirs * H), jnp.float32)  # PyTorch zero init
    jax.lax.fori_loop(0, seq_len, step, (zeros, zeros))


def bilstm_scan(gx, whh_cat, *, hidden, num_dirs):
    """gx: (T, B, num_dirs*4H) gate pre-activations, forward time order for
    both directions. whh_cat: (num_dirs*H, num_dirs*4H) block-diagonal
    recurrent weights (bf16). Returns h: (T, B, num_dirs*H) float32."""
    # TODO(synk): for production T the full gates block must fit VMEM; chunk
    # the time axis (emit_pipeline) if T*B*num_dirs*4H*4B exceeds the budget.
    T, B, Gd = gx.shape
    D = num_dirs * hidden
    return pl.pallas_call(
        functools.partial(_bilstm_kernel, hidden=hidden, num_dirs=num_dirs,
                          seq_len=T, batch=B),
        out_shape=jax.ShapeDtypeStruct((T, B, D), jnp.float32),
        grid=(1,),
        in_specs=[
            pl.BlockSpec((T, B, Gd), lambda i: (0, 0, 0)),
            pl.BlockSpec(whh_cat.shape, lambda i: (0, 0)),
        ],
        out_specs=pl.BlockSpec((T, B, D), lambda i: (0, 0, 0)),
        compiler_params=pltpu.CompilerParams(
            dimension_semantics=("arbitrary",)),
    )(gx, whh_cat)


# ---------------------------------------------------------------------------
# Kernel 3: fused hid2out head.
# replicate-pad Conv1d(C,C,smooth) + LeakyReLU + Conv1d(C,num_classes,1),
# channels-last, fully VMEM-resident per batch element; output channels padded
# to 128 (lane-dense stores). The smooth conv is an unrolled sum of
# tap-shifted matmuls (no im2col gather).
# ---------------------------------------------------------------------------
def _head_kernel(x_ref, w_sm_ref, b_sm_ref, w_out_ref, b_out_ref, y_ref, *,
                 smooth, t_out, slope):
    x = x_ref[0]                                        # (T + 2*pad, C)
    acc = jnp.zeros((t_out, w_sm_ref.shape[2]), jnp.float32)
    for tap in range(smooth):                           # static unroll
        acc += jnp.dot(x[tap:tap + t_out, :], w_sm_ref[tap],
                       preferred_element_type=jnp.float32)
    acc += b_sm_ref[...]
    acc = jnp.where(acc >= 0.0, acc, slope * acc)       # LeakyReLU
    y = jnp.dot(acc, w_out_ref[...],
                preferred_element_type=jnp.float32) + b_out_ref[...]
    y_ref[0] = y.astype(y_ref.dtype)


def smooth_head(h_btc, head, *, num_classes, negative_slope=0.01):
    """h_btc: (B, T, C) channels-last LSTM output; head: prepared weights.
    Returns (B, num_classes, T_out) NCW.  (T_out == T for odd `smooth`.)"""
    B, T, C = h_btc.shape
    smooth = head["w_sm_taps"].shape[0]
    pad = smooth // 2
    t_out = T + 2 * pad - smooth + 1
    n_pad = head["w_out"].shape[1]
    # replicate padding (PyTorch padding_mode='replicate')
    x_pad = jnp.pad(h_btc, ((0, 0), (pad, pad), (0, 0)), mode="edge")
    y = pl.pallas_call(
        functools.partial(_head_kernel, smooth=smooth, t_out=t_out,
                          slope=float(negative_slope)),
        out_shape=jax.ShapeDtypeStruct((B, t_out, n_pad), jnp.float32),
        grid=(B,),
        in_specs=[
            pl.BlockSpec((1, T + 2 * pad, C), lambda b: (b, 0, 0)),
            pl.BlockSpec(head["w_sm_taps"].shape, lambda b: (0, 0, 0)),
            pl.BlockSpec((1, C), lambda b: (0, 0)),
            pl.BlockSpec((C, n_pad), lambda b: (0, 0)),
            pl.BlockSpec((1, n_pad), lambda b: (0, 0)),
        ],
        out_specs=pl.BlockSpec((1, t_out, n_pad), lambda b: (b, 0, 0)),
        compiler_params=pltpu.CompilerParams(
            dimension_semantics=("parallel",)),
    )(x_pad, head["w_sm_taps"], head["b_sm"], head["w_out"], head["b_out"])
    return jnp.transpose(y[:, :, :num_classes], (0, 2, 1))


# ---------------------------------------------------------------------------
# One-time parameter preparation (no per-forward weight transposes/pads).
# ---------------------------------------------------------------------------
def prepare_params(params, *, hidden_size, bidirectional, num_classes,
                   compute_dtype=jnp.bfloat16):
    num_dirs = 2 if bidirectional else 1
    H = hidden_size
    lstm = []
    for layer_params in params["lstm"]:
        w_ih_cols, bias_cols = [], []
        whh = jnp.zeros((num_dirs * H, num_dirs * 4 * H), jnp.float32)
        for d, p in enumerate(layer_params):
            w_ih_cols.append(jnp.transpose(p["w_ih"]))             # (in, 4H)
            bias_cols.append(p["b_ih"] + p["b_hh"])                # (4H,)
            whh = whh.at[d * H:(d + 1) * H,
                         d * 4 * H:(d + 1) * 4 * H].set(jnp.transpose(p["w_hh"]))
        lstm.append({
            "w_ih_cat": jnp.concatenate(w_ih_cols, axis=1).astype(compute_dtype),
            "bias_cat": jnp.concatenate(bias_cols).reshape(1, -1)
                           .astype(jnp.float32),
            # bf16 recurrent weights, f32 accumulation & f32 h/c state in-kernel
            "w_hh_cat": whh.astype(compute_dtype),
        })
    C = num_dirs * H
    n_pad = _round_up(num_classes, 128)
    head = {
        "w_sm_taps": jnp.transpose(params["conv1_w"], (2, 1, 0)),  # (smooth,Cin,Cout)
        "b_sm": params["conv1_b"].reshape(1, C),
        "w_out": jnp.pad(jnp.transpose(params["conv2_w"][:, :, 0]),
                         ((0, 0), (0, n_pad - num_classes))),
        "b_out": jnp.pad(params["conv2_b"].reshape(1, num_classes),
                         ((0, 0), (0, n_pad - num_classes))),
    }
    return {"lstm": lstm, "head": head}


# ---------------------------------------------------------------------------
# LSTMHead forward
# ---------------------------------------------------------------------------
def lstm_head_forward(prepared, x, *, hidden_size, hidden_layers,
                      bidirectional, num_classes, negative_slope=0.01):
    """x: (B, input_size, T) NCW, like the PyTorch module."""
    B, _, T = x.shape
    num_dirs = 2 if bidirectional else 1
    # x.transpose(1,2) -> batch_first; additionally go time-major once so the
    # recurrence streams contiguous (B, num_dirs*4H) gate rows per step.
    h = jnp.transpose(x, (2, 0, 1))                     # (T, B, input_size)
    for layer in range(hidden_layers):
        lp = prepared["lstm"][layer]
        in_size = h.shape[-1]
        gx = matmul_bias(h.reshape(T * B, in_size), lp["w_ih_cat"],
                         lp["bias_cat"])                # (T*B, num_dirs*4H)
        gx = gx.reshape(T, B, num_dirs * 4 * hidden_size)
        h = bilstm_scan(gx, lp["w_hh_cat"], hidden=hidden_size,
                        num_dirs=num_dirs)              # (T, B, num_dirs*H)
        # TODO(synk): inter-layer LSTM dropout and self.dropout are eval-mode
        # identities (training-mode dropout masks not implemented).
    h_btc = jnp.transpose(h, (1, 0, 2))                 # (B, T, num_dirs*H)
    return smooth_head(h_btc, prepared["head"], num_classes=num_classes,
                       negative_slope=negative_slope)


def init_params(key, *, input_size, hidden_size, hidden_layers, num_classes,
                bidirectional, smooth):
    num_dirs = 2 if bidirectional else 1
    h_size = hidden_size * num_dirs

    def nxt():
        nonlocal key
        key, sub = jax.random.split(key)
        return sub

    lstm = []
    for layer in range(hidden_layers):
        in_size = input_size if layer == 0 else h_size
        dirs = []
        for _ in range(num_dirs):
            dirs.append({
                "w_ih": 0.1 * jax.random.normal(
                    nxt(), (4 * hidden_size, in_size), jnp.float32),
                "w_hh": 0.1 * jax.random.normal(
                    nxt(), (4 * hidden_size, hidden_size), jnp.float32),
                "b_ih": 0.01 * jax.random.normal(
                    nxt(), (4 * hidden_size,), jnp.float32),
                "b_hh": 0.01 * jax.random.normal(
                    nxt(), (4 * hidden_size,), jnp.float32),
            })
        lstm.append(dirs)
    return {
        "lstm": lstm,
        # hid2out: Conv1d(h, h, smooth, replicate) -> LeakyReLU -> Conv1d(h, cla, 1)
        "conv1_w": 0.1 * jax.random.normal(nxt(), (h_size, h_size, smooth), jnp.float32),
        "conv1_b": jnp.zeros((h_size,), jnp.float32),
        "conv2_w": 0.1 * jax.random.normal(nxt(), (num_classes, h_size, 1), jnp.float32),
        "conv2_b": jnp.zeros((num_classes,), jnp.float32),
    }


if __name__ == "__main__":
    key = jax.random.PRNGKey(0)
    k_par, k_sig = jax.random.split(key)

    B, T = 2, 64
    input_size, hidden_size, hidden_layers = 64, 32, 2
    num_classes, smooth, bidirectional = 10, 3, True

    params = init_params(k_par, input_size=input_size, hidden_size=hidden_size,
                         hidden_layers=hidden_layers, num_classes=num_classes,
                         bidirectional=bidirectional, smooth=smooth)
    prepared = prepare_params(params, hidden_size=hidden_size,
                              bidirectional=bidirectional,
                              num_classes=num_classes)
    x = jax.random.normal(k_sig, (B, input_size, T), jnp.float32)   # NCW input

    fwd = jax.jit(functools.partial(
        lstm_head_forward, hidden_size=hidden_size,
        hidden_layers=hidden_layers, bidirectional=bidirectional,
        num_classes=num_classes))
    y = fwd(prepared, x)
    jax.block_until_ready(y)

    assert y.shape == (B, num_classes, T), y.shape
    print("KERNEL_OK")
</pallas_src>

<mosaic_0001>
module attributes {stable_mosaic.version = 11 : i64} {
  func.func @_matmul_bias_kernel(%arg0: i32, %arg1: memref<64x64xbf16, #tpu.memory_space<vmem>>, %arg2: memref<64x256xbf16, #tpu.memory_space<vmem>>, %arg3: memref<1x256xf32, #tpu.memory_space<vmem>>, %arg4: memref<64x256xf32, #tpu.memory_space<vmem>>) attributes {dimension_semantics = [#tpu.dimension_semantics<parallel>], iteration_bounds = array<i64: 2>, scalar_prefetch = 0 : i64, scratch_operands = 0 : i64, tpu.core_type = #tpu.core_type<tc>, window_params = [{transform_indices = @transform_0, window_bounds = array<i64: 64, 64>}, {pipeline_mode = #tpu.pipeline_mode<synchronous>, transform_indices = @transform_1, window_bounds = array<i64: 64, 256>}, {pipeline_mode = #tpu.pipeline_mode<synchronous>, transform_indices = @transform_2, window_bounds = array<i64: 1, 256>}, {transform_indices = @transform_3, window_bounds = array<i64: 64, 256>}]} {
    %c0 = arith.constant 0 : index
    %c0_0 = arith.constant 0 : index
    %0 = vector.load %arg1[%c0, %c0_0] : memref<64x64xbf16, #tpu.memory_space<vmem>>, vector<64x64xbf16>
    %c0_1 = arith.constant 0 : index
    %c0_2 = arith.constant 0 : index
    %1 = vector.load %arg2[%c0_1, %c0_2] : memref<64x256xbf16, #tpu.memory_space<vmem>>, vector<64x256xbf16>
    %cst = arith.constant dense<0.000000e+00> : vector<64x256xf32>
    %2 = tpu.matmul %0, %1, %cst {dimension_numbers = #tpu.dot_dimension_numbers<[1], [0], [0], [1], [0, 0, 1, 1], [], []>} : vector<64x64xbf16>, vector<64x256xbf16>, vector<64x256xf32> -> vector<64x256xf32>
    %c0_3 = arith.constant 0 : index
    %c0_4 = arith.constant 0 : index
    %3 = vector.load %arg3[%c0_3, %c0_4] : memref<1x256xf32, #tpu.memory_space<vmem>>, vector<1x256xf32>
    %4 = vector.broadcast %3 : vector<1x256xf32> to vector<64x256xf32>
    %5 = arith.addf %2, %4 : vector<64x256xf32>
    %c0_5 = arith.constant 0 : index
    %c0_6 = arith.constant 0 : index
    %6 = vector.load %arg4[%c0_5, %c0_6] : memref<64x256xf32, #tpu.memory_space<vmem>>, vector<64x256xf32>
    tpu.vector_store %arg4[%c0_5, %c0_6], %5 {strides = array<i32>} : memref<64x256xf32, #tpu.memory_space<vmem>>, vector<64x256xf32>,
    return
  }
  func.func @transform_0(%arg0: i32) -> (i32, i32) {
    %c0_i32 = arith.constant 0 : i32
    %c0_i32_0 = arith.constant 0 : i32
    return %arg0, %c0_i32 : i32, i32
  }
  func.func @transform_1(%arg0: i32) -> (i32, i32) {
    %c0_i32 = arith.constant 0 : i32
    %c0_i32_0 = arith.constant 0 : i32
    %c0_i32_1 = arith.constant 0 : i32
    return %c0_i32, %c0_i32_0 : i32, i32
  }
  func.func @transform_2(%arg0: i32) -> (i32, i32) {
    %c0_i32 = arith.constant 0 : i32
    %c0_i32_0 = arith.constant 0 : i32
    %c0_i32_1 = arith.constant 0 : i32
    return %c0_i32, %c0_i32_0 : i32, i32
  }
  func.func @transform_3(%arg0: i32) -> (i32, i32) {
    %c0_i32 = arith.constant 0 : i32
    %c0_i32_0 = arith.constant 0 : i32
    return %arg0, %c0_i32 : i32, i32
  }
}

module attributes {stable_mosaic.version = 11 : i64} {
  func.func @_bilstm_kernel(%arg0: i32, %arg1: memref<64x2x256xf32, #tpu.memory_space<vmem>>, %arg2: memref<64x256xbf16, #tpu.memory_space<vmem>>, %arg3: memref<64x2x64xf32, #tpu.memory_space<vmem>>) attributes {dimension_semantics = [#tpu.dimension_semantics<arbitrary>], iteration_bounds = array<i64: 1>, scalar_prefetch = 0 : i64, scratch_operands = 0 : i64, tpu.core_type = #tpu.core_type<tc>, window_params = [{pipeline_mode = #tpu.pipeline_mode<synchronous>, transform_indices = @transform_0, window_bounds = array<i64: 64, 2, 256>}, {pipeline_mode = #tpu.pipeline_mode<synchronous>, transform_indices = @transform_1, window_bounds = array<i64: 64, 256>}, {pipeline_mode = #tpu.pipeline_mode<synchronous>, transform_indices = @transform_2, window_bounds = array<i64: 64, 2, 64>}]} {
    %cst = arith.constant 0.000000e+00 : f32
    %0 = vector.broadcast %cst : f32 to vector<2x64xf32>
    %c0_i32 = arith.constant 0 : i32
    %c64_i32 = arith.constant 64 : i32
    %1 = arith.addi %c0_i32, %c64_i32 : i32
    %c1_i32 = arith.constant 1 : i32
    %2:2 = scf.for %arg4 = %c0_i32 to %1 step %c1_i32 iter_args(%arg5 = %0, %arg6 = %0) -> (vector<2x64xf32>, vector<2x64xf32>)  : i32 {
      %3 = arith.truncf %arg5 : vector<2x64xf32> to vector<2x64xbf16>
      %c0 = arith.constant 0 : index
      %c0_1 = arith.constant 0 : index
      %4 = vector.load %arg2[%c0, %c0_1] : memref<64x256xbf16, #tpu.memory_space<vmem>>, vector<64x256xbf16>
      %cst_2 = arith.constant dense<0.000000e+00> : vector<2x256xf32>
      %5 = tpu.matmul %3, %4, %cst_2 {dimension_numbers = #tpu.dot_dimension_numbers<[1], [0], [0], [1], [0, 0, 1, 1], [], []>} : vector<2x64xbf16>, vector<64x256xbf16>, vector<2x256xf32> -> vector<2x256xf32>
      %6 = arith.index_cast %arg4 : i32 to index
      %c0_3 = arith.constant 0 : index
      %c0_4 = arith.constant 0 : index
      %7 = vector.load %arg1[%6, %c0_3, %c0_4] : memref<64x2x256xf32, #tpu.memory_space<vmem>>, vector<1x2x128xf32>
      %8 = vector.shape_cast %7 : vector<1x2x128xf32> to vector<2x128xf32>
      %9 = vector.extract_strided_slice %5 {offsets = [0, 0], sizes = [2, 128], strides = [1, 1]} : vector<2x256xf32> to vector<2x128xf32>
      %10 = arith.addf %8, %9 : vector<2x128xf32>
      %11 = vector.extract_strided_slice %arg6 {offsets = [0, 0], sizes = [2, 32], strides = [1, 1]} : vector<2x64xf32> to vector<2x32xf32>
      %12 = vector.extract_strided_slice %10 {offsets = [0, 0], sizes = [2, 32], strides = [1, 1]} : vector<2x128xf32> to vector<2x32xf32>
      %13 = arith.negf %12 : vector<2x32xf32>
      %14 = math.exp %13 : vector<2x32xf32>
      %cst_5 = arith.constant 1.000000e+00 : f32
      %15 = vector.broadcast %cst_5 : f32 to vector<2x32xf32>
      %16 = arith.addf %15, %14 : vector<2x32xf32>
      %17 = arith.divf %15, %16 : vector<2x32xf32>
      %18 = vector.extract_strided_slice %10 {offsets = [0, 32], sizes = [2, 32], strides = [1, 1]} : vector<2x128xf32> to vector<2x32xf32>
      %19 = arith.negf %18 : vector<2x32xf32>
      %20 = math.exp %19 : vector<2x32xf32>
      %cst_6 = arith.constant 1.000000e+00 : f32
      %21 = vector.broadcast %cst_6 : f32 to vector<2x32xf32>
      %22 = arith.addf %21, %20 : vector<2x32xf32>
      %23 = arith.divf %21, %22 : vector<2x32xf32>
      %24 = vector.extract_strided_slice %10 {offsets = [0, 64], sizes = [2, 32], strides = [1, 1]} : vector<2x128xf32> to vector<2x32xf32>
      %25 = math.tanh %24 : vector<2x32xf32>
      %26 = vector.extract_strided_slice %10 {offsets = [0, 96], sizes = [2, 32], strides = [1, 1]} : vector<2x128xf32> to vector<2x32xf32>
      %27 = arith.negf %26 : vector<2x32xf32>
      %28 = math.exp %27 : vector<2x32xf32>
      %cst_7 = arith.constant 1.000000e+00 : f32
      %29 = vector.broadcast %cst_7 : f32 to vector<2x32xf32>
      %30 = arith.addf %29, %28 : vector<2x32xf32>
      %31 = arith.divf %29, %30 : vector<2x32xf32>
      %32 = arith.mulf %23, %11 : vector<2x32xf32>
      %33 = arith.mulf %17, %25 : vector<2x32xf32>
      %34 = arith.addf %32, %33 : vector<2x32xf32>
      %35 = math.tanh %34 : vector<2x32xf32>
      %36 = arith.mulf %31, %35 : vector<2x32xf32>
      %37 = arith.index_cast %arg4 : i32 to index
      %c0_8 = arith.constant 0 : index
      %c0_9 = arith.constant 0 : index
      %38 = vector.load %arg3[%37, %c0_8, %c0_9] : memref<64x2x64xf32, #tpu.memory_space<vmem>>, vector<1x2x32xf32>
      %39 = vector.shape_cast %38 : vector<1x2x32xf32> to vector<2x32xf32>
      %40 = vector.shape_cast %36 : vector<2x32xf32> to vector<1x2x32xf32>
      tpu.vector_store %arg3[%37, %c0_8, %c0_9], %40 {strides = array<i32>} : memref<64x2x64xf32, #tpu.memory_space<vmem>>, vector<1x2x32xf32>,
      %c63_i32 = arith.constant 63 : i32
      %41 = arith.subi %c63_i32, %arg4 : i32
      %42 = arith.index_cast %41 : i32 to index
      %c0_10 = arith.constant 0 : index
      %c128 = arith.constant 128 : index
      %43 = vector.load %arg1[%42, %c0_10, %c128] : memref<64x2x256xf32, #tpu.memory_space<vmem>>, vector<1x2x128xf32>
      %44 = vector.shape_cast %43 : vector<1x2x128xf32> to vector<2x128xf32>
      %45 = vector.extract_strided_slice %5 {offsets = [0, 128], sizes = [2, 128], strides = [1, 1]} : vector<2x256xf32> to vector<2x128xf32>
      %46 = arith.addf %44, %45 : vector<2x128xf32>
      %47 = vector.extract_strided_slice %arg6 {offsets = [0, 32], sizes = [2, 32], strides = [1, 1]} : vector<2x64xf32> to vector<2x32xf32>
      %48 = vector.extract_strided_slice %46 {offsets = [0, 0], sizes = [2, 32], strides = [1, 1]} : vector<2x128xf32> to vector<2x32xf32>
      %49 = arith.negf %48 : vector<2x32xf32>
      %50 = math.exp %49 : vector<2x32xf32>
      %cst_11 = arith.constant 1.000000e+00 : f32
      %51 = vector.broadcast %cst_11 : f32 to vector<2x32xf32>
      %52 = arith.addf %51, %50 : vector<2x32xf32>
      %53 = arith.divf %51, %52 : vector<2x32xf32>
      %54 = vector.extract_strided_slice %46 {offsets = [0, 32], sizes = [2, 32], strides = [1, 1]} : vector<2x128xf32> to vector<2x32xf32>
      %55 = arith.negf %54 : vector<2x32xf32>
      %56 = math.exp %55 : vector<2x32xf32>
      %cst_12 = arith.constant 1.000000e+00 : f32
      %57 = vector.broadcast %cst_12 : f32 to vector<2x32xf32>
      %58 = arith.addf %57, %56 : vector<2x32xf32>
      %59 = arith.divf %57, %58 : vector<2x32xf32>
      %60 = vector.extract_strided_slice %46 {offsets = [0, 64], sizes = [2, 32], strides = [1, 1]} : vector<2x128xf32> to vector<2x32xf32>
      %61 = math.tanh %60 : vector<2x32xf32>
      %62 = vector.extract_strided_slice %46 {offsets = [0, 96], sizes = [2, 32], strides = [1, 1]} : vector<2x128xf32> to vector<2x32xf32>
      %63 = arith.negf %62 : vector<2x32xf32>
      %64 = math.exp %63 : vector<2x32xf32>
      %cst_13 = arith.constant 1.000000e+00 : f32
      %65 = vector.broadcast %cst_13 : f32 to vector<2x32xf32>
      %66 = arith.addf %65, %64 : vector<2x32xf32>
      %67 = arith.divf %65, %66 : vector<2x32xf32>
      %68 = arith.mulf %59, %47 : vector<2x32xf32>
      %69 = arith.mulf %53, %61 : vector<2x32xf32>
      %70 = arith.addf %68, %69 : vector<2x32xf32>
      %71 = math.tanh %70 : vector<2x32xf32>
      %72 = arith.mulf %67, %71 : vector<2x32xf32>
      %73 = arith.index_cast %41 : i32 to index
      %c0_14 = arith.constant 0 : index
      %c32 = arith.constant 32 : index
      %74 = vector.load %arg3[%73, %c0_14, %c32] : memref<64x2x64xf32, #tpu.memory_space<vmem>>, vector<1x2x32xf32>
      %75 = vector.shape_cast %74 : vector<1x2x32xf32> to vector<2x32xf32>
      %76 = vector.shape_cast %72 : vector<2x32xf32> to vector<1x2x32xf32>
      tpu.vector_store %arg3[%73, %c0_14, %c32], %76 {strides = array<i32>} : memref<64x2x64xf32, #tpu.memory_space<vmem>>, vector<1x2x32xf32>,
      %77 = tpu.concatenate %36, %72 in 1 : vector<2x32xf32>, vector<2x32xf32> -> vector<2x64xf32>
      %78 = tpu.concatenate %34, %70 in 1 : vector<2x32xf32>, vector<2x32xf32> -> vector<2x64xf32>
      scf.yield %77, %78 : vector<2x64xf32>, vector<2x64xf32>
    }
    %c64_i32_0 = arith.constant 64 : i32
    return
  }
  func.func @transform_0(%arg0: i32) -> (i32, i32, i32) {
    %c0_i32 = arith.constant 0 : i32
    %c0_i32_0 = arith.constant 0 : i32
    %c0_i32_1 = arith.constant 0 : i32
    %c0_i32_2 = arith.constant 0 : i32
    return %c0_i32, %c0_i32_0, %c0_i32_1 : i32, i32, i32
  }
  func.func @transform_1(%arg0: i32) -> (i32, i32) {
    %c0_i32 = arith.constant 0 : i32
    %c0_i32_0 = arith.constant 0 : i32
    %c0_i32_1 = arith.constant 0 : i32
    return %c0_i32, %c0_i32_0 : i32, i32
  }
  func.func @transform_2(%arg0: i32) -> (i32, i32, i32) {
    %c0_i32 = arith.constant 0 : i32
    %c0_i32_0 = arith.constant 0 : i32
    %c0_i32_1 = arith.constant 0 : i32
    %c0_i32_2 = arith.constant 0 : i32
    return %c0_i32, %c0_i32_0, %c0_i32_1 : i32, i32, i32
  }
}

module attributes {stable_mosaic.version = 11 : i64} {
  func.func @_head_kernel(%arg0: i32, %arg1: memref<1x66x64xf32, #tpu.memory_space<vmem>>, %arg2: memref<3x64x64xf32, #tpu.memory_space<vmem>>, %arg3: memref<1x64xf32, #tpu.memory_space<vmem>>, %arg4: memref<64x128xf32, #tpu.memory_space<vmem>>, %arg5: memref<1x128xf32, #tpu.memory_space<vmem>>, %arg6: memref<1x64x128xf32, #tpu.memory_space<vmem>>) attributes {dimension_semantics = [#tpu.dimension_semantics<parallel>], iteration_bounds = array<i64: 2>, scalar_prefetch = 0 : i64, scratch_operands = 0 : i64, tpu.core_type = #tpu.core_type<tc>, window_params = [{transform_indices = @transform_0, window_bounds = array<i64: 1, 66, 64>}, {pipeline_mode = #tpu.pipeline_mode<synchronous>, transform_indices = @transform_1, window_bounds = array<i64: 3, 64, 64>}, {pipeline_mode = #tpu.pipeline_mode<synchronous>, transform_indices = @transform_2, window_bounds = array<i64: 1, 64>}, {pipeline_mode = #tpu.pipeline_mode<synchronous>, transform_indices = @transform_3, window_bounds = array<i64: 64, 128>}, {pipeline_mode = #tpu.pipeline_mode<synchronous>, transform_indices = @transform_4, window_bounds = array<i64: 1, 128>}, {transform_indices = @transform_5, window_bounds = array<i64: 1, 64, 128>}]} {
    %c0 = arith.constant 0 : index
    %c0_0 = arith.constant 0 : index
    %c0_1 = arith.constant 0 : index
    %0 = vector.load %arg1[%c0, %c0_0, %c0_1] : memref<1x66x64xf32, #tpu.memory_space<vmem>>, vector<1x66x64xf32>
    %1 = vector.shape_cast %0 : vector<1x66x64xf32> to vector<66x64xf32>
    %cst = arith.constant 0.000000e+00 : f32
    %2 = vector.broadcast %cst : f32 to vector<64x64xf32>
    %3 = vector.extract_strided_slice %1 {offsets = [0, 0], sizes = [64, 64], strides = [1, 1]} : vector<66x64xf32> to vector<64x64xf32>
    %c0_2 = arith.constant 0 : index
    %c0_3 = arith.constant 0 : index
    %c0_4 = arith.constant 0 : index
    %4 = vector.load %arg2[%c0_2, %c0_3, %c0_4] : memref<3x64x64xf32, #tpu.memory_space<vmem>>, vector<1x64x64xf32>
    %5 = vector.shape_cast %4 : vector<1x64x64xf32> to vector<64x64xf32>
    %cst_5 = arith.constant dense<0.000000e+00> : vector<64x64xf32>
    %6 = tpu.matmul %3, %5, %cst_5 {dimension_numbers = #tpu.dot_dimension_numbers<[1], [0], [0], [1], [0, 0, 1, 1], [], []>} : vector<64x64xf32>, vector<64x64xf32>, vector<64x64xf32> -> vector<64x64xf32>
    %7 = arith.addf %2, %6 : vector<64x64xf32>
    %8 = vector.extract_strided_slice %1 {offsets = [1, 0], sizes = [64, 64], strides = [1, 1]} : vector<66x64xf32> to vector<64x64xf32>
    %c1 = arith.constant 1 : index
    %c0_6 = arith.constant 0 : index
    %c0_7 = arith.constant 0 : index
    %9 = vector.load %arg2[%c1, %c0_6, %c0_7] : memref<3x64x64xf32, #tpu.memory_space<vmem>>, vector<1x64x64xf32>
    %10 = vector.shape_cast %9 : vector<1x64x64xf32> to vector<64x64xf32>
    %cst_8 = arith.constant dense<0.000000e+00> : vector<64x64xf32>
    %11 = tpu.matmul %8, %10, %cst_8 {dimension_numbers = #tpu.dot_dimension_numbers<[1], [0], [0], [1], [0, 0, 1, 1], [], []>} : vector<64x64xf32>, vector<64x64xf32>, vector<64x64xf32> -> vector<64x64xf32>
    %12 = arith.addf %7, %11 : vector<64x64xf32>
    %13 = vector.extract_strided_slice %1 {offsets = [2, 0], sizes = [64, 64], strides = [1, 1]} : vector<66x64xf32> to vector<64x64xf32>
    %c2 = arith.constant 2 : index
    %c0_9 = arith.constant 0 : index
    %c0_10 = arith.constant 0 : index
    %14 = vector.load %arg2[%c2, %c0_9, %c0_10] : memref<3x64x64xf32, #tpu.memory_space<vmem>>, vector<1x64x64xf32>
    %15 = vector.shape_cast %14 : vector<1x64x64xf32> to vector<64x64xf32>
    %cst_11 = arith.constant dense<0.000000e+00> : vector<64x64xf32>
    %16 = tpu.matmul %13, %15, %cst_11 {dimension_numbers = #tpu.dot_dimension_numbers<[1], [0], [0], [1], [0, 0, 1, 1], [], []>} : vector<64x64xf32>, vector<64x64xf32>, vector<64x64xf32> -> vector<64x64xf32>
    %17 = arith.addf %12, %16 : vector<64x64xf32>
    %c0_12 = arith.constant 0 : index
    %c0_13 = arith.constant 0 : index
    %18 = vector.load %arg3[%c0_12, %c0_13] : memref<1x64xf32, #tpu.memory_space<vmem>>, vector<1x64xf32>
    %19 = vector.broadcast %18 : vector<1x64xf32> to vector<64x64xf32>
    %20 = arith.addf %17, %19 : vector<64x64xf32>
    %cst_14 = arith.constant 0.000000e+00 : f32
    %21 = vector.broadcast %cst_14 : f32 to vector<64x64xf32>
    %22 = arith.cmpf oge, %20, %21 : vector<64x64xf32>
    %cst_15 = arith.constant 0.00999999977 : f32
    %23 = vector.broadcast %cst_15 : f32 to vector<64x64xf32>
    %24 = arith.mulf %23, %20 : vector<64x64xf32>
    %25 = arith.select %22, %20, %24 : vector<64x64xi1>, vector<64x64xf32>
    %c0_16 = arith.constant 0 : index
    %c0_17 = arith.constant 0 : index
    %26 = vector.load %arg4[%c0_16, %c0_17] : memref<64x128xf32, #tpu.memory_space<vmem>>, vector<64x128xf32>
    %cst_18 = arith.constant dense<0.000000e+00> : vector<64x128xf32>
    %27 = tpu.matmul %25, %26, %cst_18 {dimension_numbers = #tpu.dot_dimension_numbers<[1], [0], [0], [1], [0, 0, 1, 1], [], []>} : vector<64x64xf32>, vector<64x128xf32>, vector<64x128xf32> -> vector<64x128xf32>
    %c0_19 = arith.constant 0 : index
    %c0_20 = arith.constant 0 : index
    %28 = vector.load %arg5[%c0_19, %c0_20] : memref<1x128xf32, #tpu.memory_space<vmem>>, vector<1x128xf32>
    %29 = vector.broadcast %28 : vector<1x128xf32> to vector<64x128xf32>
    %30 = arith.addf %27, %29 : vector<64x128xf32>
    %c0_21 = arith.constant 0 : index
    %c0_22 = arith.constant 0 : index
    %c0_23 = arith.constant 0 : index
    %31 = vector.load %arg6[%c0_21, %c0_22, %c0_23] : memref<1x64x128xf32, #tpu.memory_space<vmem>>, vector<1x64x128xf32>
    %32 = vector.shape_cast %31 : vector<1x64x128xf32> to vector<64x128xf32>
    %33 = vector.shape_cast %30 : vector<64x128xf32> to vector<1x64x128xf32>
    tpu.vector_store %arg6[%c0_21, %c0_22, %c0_23], %33 {strides = array<i32>} : memref<1x64x128xf32, #tpu.memory_space<vmem>>, vector<1x64x128xf32>,
    return
  }
  func.func @transform_0(%arg0: i32) -> (i32, i32, i32) {
    %c0_i32 = arith.constant 0 : i32
    %c0_i32_0 = arith.constant 0 : i32
    %c0_i32_1 = arith.constant 0 : i32
    return %arg0, %c0_i32, %c0_i32_0 : i32, i32, i32
  }
  func.func @transform_1(%arg0: i32) -> (i32, i32, i32) {
    %c0_i32 = arith.constant 0 : i32
    %c0_i32_0 = arith.constant 0 : i32
    %c0_i32_1 = arith.constant 0 : i32
    %c0_i32_2 = arith.constant 0 : i32
    return %c0_i32, %c0_i32_0, %c0_i32_1 : i32, i32, i32
  }
  func.func @transform_2(%arg0: i32) -> (i32, i32) {
    %c0_i32 = arith.constant 0 : i32
    %c0_i32_0 = arith.constant 0 : i32
    %c0_i32_1 = arith.constant 0 : i32
    return %c0_i32, %c0_i32_0 : i32, i32
  }
  func.func @transform_3(%arg0: i32) -> (i32, i32) {
    %c0_i32 = arith.constant 0 : i32
    %c0_i32_0 = arith.constant 0 : i32
    %c0_i32_1 = arith.constant 0 : i32
    return %c0_i32, %c0_i32_0 : i32, i32
  }
  func.func @transform_4(%arg0: i32) -> (i32, i32) {
    %c0_i32 = arith.constant 0 : i32
    %c0_i32_0 = arith.constant 0 : i32
    %c0_i32_1 = arith.constant 0 : i32
    return %c0_i32, %c0_i32_0 : i32, i32
  }
  func.func @transform_5(%arg0: i32) -> (i32, i32, i32) {
    %c0_i32 = arith.constant 0 : i32
    %c0_i32_0 = arith.constant 0 : i32
    %c0_i32_1 = arith.constant 0 : i32
    return %arg0, %c0_i32, %c0_i32_0 : i32, i32, i32
  }
}

</mosaic_0001>

<llo_original>
// kernel: lstm_head_forward.5
$region0: #{lstm_head_forward.5}
  #allocation0 [shape = 'u32[]', space=smem, size = 0x4, offset = 0x4, fixed_abs, tag = 'smem constant byte address 0x4 - core index']
  #allocation1 [shape = 'u32[72,128]{1,0:T(1,128)}', space=vmem, size = 0x9000, scoped, tag = 'internal scratch']
  %s0 = inlined_call_operand.vmem [shape: bf16[128,64], index: 0, kind: input, shape index: {}]
  %s1 = inlined_call_operand.vmem [shape: bf16[64,256], index: 1, kind: input, shape index: {}]
  %s2 = inlined_call_operand.vmem [shape: f32[1,256], index: 2, kind: input, shape index: {}]
  %s3 = inlined_call_operand.vmem [shape: f32[128,256], index: 3, kind: output, shape index: {}]
  %s4 = sld [smem:[#allocation0]]
  $region45: #{lstm_head_forward.5} parent=0
    _
  %s6 = ssub.s32 1, %s4
  %s7 = scalar_select 0, %s6, %s4
  loop: start=0, step=1, limit=4
  $region2: #{lstm_head_forward.5} parent=0 // loop_pre_header
    _
  $region3: #{lstm_head_forward.5} parent=0 // loop_header
    %s9 = sphi 0, %s13
    %p10 = scmp.ge.s32.totalorder %s9, 4
    %s19 = sphi 0, %s21
    %s22 = sphi 0, %s19
    %s23 = sphi 0, %s22
    %s39 = sphi 0, %s23
    %s43 = sphi 0, %s43
    %s45 = sphi 0, %s43
    %s46 = sphi 0, %s45
    %s60 = sphi 0, %s46
    %s64 = sphi 0, %s64
    %s66 = sphi 0, %s64
    %s67 = sphi 0, %s66
    %s81 = sphi 0, %s67
    %s87 = sphi 0, %s89
    %s90 = sphi 0, %s87
    %s91 = sphi 0, %s90
    %s107 = sphi 0, %s91
  $region4: #{lstm_head_forward.5} parent=0 // loop_header_branch
    %12 = sbr.rel (%p10) target = $region8
  $region5: #{lstm_head_forward.5} parent=0 // loop_body
    %s14 = ssub.s32 %s9, 1
    %s15 = ssub.s32 %s9, 2
    %s16 = sadd.s32 %s9, 1
    %s17 = ssub.s32 %s9, %s16
    %p18 = scmp.eq.s32.totalorder %s17, 0
    %s20 = sadd.s32 %s19, 1
    %s21 = scalar_select %p18, %s19, %s20
    %p24 = pneg %p18
    %p25 = scmp.eq.s32.totalorder %s9, 1
    %p26 = por %p24, %p25
    %p27 = scmp.ne.s32.totalorder %s19, %s22
    %p28 = scmp.eq.s32.totalorder %s9, 0
    %p29 = por %p27, %p28
    %p30 = scmp.ne.s32.totalorder %s19, %s22
    %p31 = scmp.eq.s32.totalorder %s14, 1
    %p32 = por %p30, %p31
    %p33 = scmp.ne.s32.totalorder %s22, %s23
    %p34 = scmp.eq.s32.totalorder %s14, 0
    %p35 = por %p33, %p34
    %p36 = scmp.ne.s32.totalorder %s22, %s23
    %p37 = scmp.eq.s32.totalorder %s15, 1
    %p38 = por %p36, %p37
    %p40 = scmp.ne.s32.totalorder %s23, %s39
    %p41 = scmp.eq.s32.totalorder %s15, 0
    %p42 = por %p40, %p41
    %s44 = sadd.s32 %s43, 1
    %p47 = scmp.eq.s32.totalorder %s9, 1
    %p48 = scmp.ne.s32.totalorder %s43, %s45
    %p49 = scmp.eq.s32.totalorder %s9, 0
    %p50 = por %p48, %p49
    %p51 = scmp.ne.s32.totalorder %s43, %s45
    %p52 = scmp.eq.s32.totalorder %s14, 1
    %p53 = por %p51, %p52
    %p54 = scmp.ne.s32.totalorder %s45, %s46
    %p55 = scmp.eq.s32.totalorder %s14, 0
    %p56 = por %p54, %p55
    %p57 = scmp.ne.s32.totalorder %s45, %s46
    %p58 = scmp.eq.s32.totalorder %s15, 1
    %p59 = por %p57, %p58
    %p61 = scmp.ne.s32.totalorder %s46, %s60
    %p62 = scmp.eq.s32.totalorder %s15, 0
    %p63 = por %p61, %p62
    %s65 = sadd.s32 %s64, 1
    %p68 = scmp.eq.s32.totalorder %s9, 1
    %p69 = scmp.ne.s32.totalorder %s64, %s66
    %p70 = scmp.eq.s32.totalorder %s9, 0
    %p71 = por %p69, %p70
    %p72 = scmp.ne.s32.totalorder %s64, %s66
    %p73 = scmp.eq.s32.totalorder %s14, 1
    %p74 = por %p72, %p73
    %p75 = scmp.ne.s32.totalorder %s66, %s67
    %p76 = scmp.eq.s32.totalorder %s14, 0
    %p77 = por %p75, %p76
    %p78 = scmp.ne.s32.totalorder %s66, %s67
    %p79 = scmp.eq.s32.totalorder %s15, 1
    %p80 = por %p78, %p79
    %p82 = scmp.ne.s32.totalorder %s67, %s81
    %p83 = scmp.eq.s32.totalorder %s15, 0
    %p84 = por %p82, %p83
    %s85 = ssub.s32 %s9, %s16
    %p86 = scmp.eq.s32.totalorder %s85, 0
    %s88 = sadd.s32 %s87, 1
    %s89 = scalar_select %p86, %s87, %s88
    %p92 = pneg %p86
    %p93 = scmp.eq.s32.totalorder %s9, 1
    %p94 = por %p92, %p93
    %p95 = scmp.ne.s32.totalorder %s87, %s90
    %p96 = scmp.eq.s32.totalorder %s9, 0
    %p97 = por %p95, %p96
    %p98 = scmp.ne.s32.totalorder %s87, %s90
    %p99 = scmp.eq.s32.totalorder %s14, 1
    %p100 = por %p98, %p99
    %p101 = scmp.ne.s32.totalorder %s90, %s91
    %p102 = scmp.eq.s32.totalorder %s14, 0
    %p103 = por %p101, %p102
    %p104 = scmp.ne.s32.totalorder %s90, %s91
    %p105 = scmp.eq.s32.totalorder %s15, 1
    %p106 = por %p104, %p105
    %p108 = scmp.ne.s32.totalorder %s91, %s107
    %p109 = scmp.eq.s32.totalorder %s15, 0
    %p110 = por %p108, %p109
    %p111 = scmp.le.s32.totalorder 1, %s9
    %p112 = scmp.lt.s32.totalorder %s9, 3
    %p113 = pnand %p111, %p112
    %p114 = pneg %p113
    // Predicated region
    $region9: #{lstm_head_forward.5} parent=5 // pred_check
      _
    $region10: #{lstm_head_forward.5} parent=5 // pred_check_branch
      %116 = sbr.rel (%p113) target = $region12
    $region11: #{lstm_head_forward.5} parent=5 // pred_region
      %s117 = ssub.s32 %s9, 1
      // Predicated region
      $region13: #{lstm_head_forward.5} parent=11 // pred_check
        %p118 = pneg %p56
      $region14: #{lstm_head_forward.5} parent=11 // pred_check_branch
        %120 = sbr.rel (%p118) target = $region16
      $region15: #{lstm_head_forward.5} parent=11 // pred_region
        _
      $region16: #{lstm_head_forward.5} parent=11 // pred_fallthru
        _
      // Predicated region
      $region17: #{lstm_head_forward.5} parent=11 // pred_check
        %p121 = pneg %p77
      $region18: #{lstm_head_forward.5} parent=11 // pred_check_branch
        %123 = sbr.rel (%p121) target = $region20
      $region19: #{lstm_head_forward.5} parent=11 // pred_region
        _
      $region20: #{lstm_head_forward.5} parent=11 // pred_fallthru
        _
    $region12: #{lstm_head_forward.5} parent=5 // pred_fallthru
      _
    %p124 = scmp.lt.s32.totalorder %s9, 2
    // Predicated region
    $region21: #{lstm_head_forward.5} parent=5 // pred_check
      %p125 = pneg %p124
    $region22: #{lstm_head_forward.5} parent=5 // pred_check_branch
      %127 = sbr.rel (%p125) target = $region24
    $region23: #{lstm_head_forward.5} parent=5 // pred_region
      // Predicated region
      $region25: #{lstm_head_forward.5} parent=23 // pred_check
        %p128 = pneg %p29
      $region26: #{lstm_head_forward.5} parent=23 // pred_check_branch
        %130 = sbr.rel (%p128) target = $region28
      $region27: #{lstm_head_forward.5} parent=23 // pred_region
        %s131 = smul.u32 8, %s9
        %p132 = scmp.lt.s32.totalorder %s131, 15
        %s133 = scalar_select %p132, %s131, 15
        %s134 = smul.addr %s133, 4
        %s135 = scalar_lea.vmem %s0, %s134
        %s136 = smul.u32 8, %s9
      $region28: #{lstm_head_forward.5} parent=23 // pred_fallthru
        _
    $region24: #{lstm_head_forward.5} parent=5 // pred_fallthru
      _
    %p137 = scmp.le.s32.totalorder 1, %s9
    %p138 = scmp.lt.s32.totalorder %s9, 3
    %p139 = pnand %p137, %p138
    %p140 = pneg %p139
    // Predicated region
    $region29: #{lstm_head_forward.5} parent=5 // pred_check
      _
    $region30: #{lstm_head_forward.5} parent=5 // pred_check_branch
      %142 = sbr.rel (%p139) target = $region32
    $region31: #{lstm_head_forward.5} parent=5 // pred_region
      %s143 = ssub.s32 %s9, 1
      %s144 = smul.u32 8, %s14
      %p145 = scmp.lt.s32.totalorder %s144, 15
      %s146 = scalar_select %p145, %s144, 15
      %s147 = smul.addr %s146, 4
      %s148 = scalar_lea.vmem %s0, %s147
      %p149 = pneg %p35
      %p150 = pneg %p32
      %p151 = pneg %p56
      %p152 = pneg %p53
      %p153 = pneg %p77
      %p154 = pneg %p74
      %p155 = pneg %p103
      %p156 = pneg %p100
      %s157 = smul.u32 8, %s14
      %p158 = scmp.lt.s32.totalorder %s157, 15
      %s159 = scalar_select %p158, %s157, 15
      %s160 = smul.addr %s159, 2
      %s161 = smul.addr %s160, 8
      %s162 = scalar_lea.vmem %s3, %s161
      %s163 = smul.u32 8, %s14
      %p164 = scmp.lt.s32.totalorder %s163, 15
      %s165 = scalar_select %p164, %s163, 15
      %s166 = smul.addr %s165, 4
      %s167 = scalar_lea.vmem %s0, %s166
      %s168 = smul.u32 8, %s14
      %s169 = smul.u32 8, %s14
      %p170 = scmp.lt.s32.totalorder %s169, 15
      %s171 = scalar_select %p170, %s169, 15
      %s172 = smul.addr %s171, 2
      %s173 = smul.addr %s172, 8
      %s174 = scalar_lea.vmem %s3, %s173
      %s175 = smul.u32 8, %s14
      %v177 = vld [vmem:[%s167] sm:$0xf]
      %v178 = vld [vmem:[%s167 + $0x4] sm:$0xf]
      %v179 = vld [vmem:[%s167 + $0x8] sm:$0xf]
      %v180 = vld [vmem:[%s167 + $0xc] sm:$0xf]
      %v181 = vld [vmem:[%s167 + $0x10] sm:$0xf]
      %v182 = vld [vmem:[%s167 + $0x14] sm:$0xf]
      %v183 = vld [vmem:[%s167 + $0x18] sm:$0xf]
      %v184 = vld [vmem:[%s167 + $0x1c] sm:$0xf]
      %v185 = vld [vmem:[%s1] sm:$0xff]
      %v186 = vld [vmem:[%s1 + $0x8] sm:$0xff]
      %v187 = vld [vmem:[%s1 + $0x10] sm:$0xff]
      %v188 = vld [vmem:[%s1 + $0x18] sm:$0xff]
      %v189 = vld [vmem:[%s1 + $0x20] sm:$0xff]
      %v190 = vld [vmem:[%s1 + $0x28] sm:$0xff]
      %v191 = vld [vmem:[%s1 + $0x30] sm:$0xff]
      %v192 = vld [vmem:[%s1 + $0x38] sm:$0xff]
      %v193 = vld [vmem:[%s2] sm:$0x3]
      %v195 = vperm.slane %v193, 0
      %v196 = vperm.slane %v193, 1
      %v207 = vunpack.c.l.b16 %v177
      %v208 = vunpack.c.l.b16 %v178
      %v209 = vunpack.c.l.b16 %v179
      %v210 = vunpack.c.l.b16 %v180
      %v211 = vunpack.c.l.b16 %v181
      %v212 = vunpack.c.l.b16 %v182
      %v213 = vunpack.c.l.b16 %v183
      %v214 = vunpack.c.l.b16 %v184
      %v215 = vpack.c.b16 %v208, %v207
      %v216 = vpack.c.b16 %v210, %v209
      %v217 = vpack.c.b16 %v212, %v211
      %v218 = vpack.c.b16 %v214, %v213
      %v227 = vunpack.c.l.b16 %v185
      %v228 = vunpack.c.h.b16 %v185
      %v229 = vunpack.c.l.b16 %v186
      %v230 = vunpack.c.h.b16 %v186
      %v231 = vunpack.c.l.b16 %v187
      %v232 = vunpack.c.h.b16 %v187
      %v233 = vunpack.c.l.b16 %v188
      %v234 = vunpack.c.h.b16 %v188
      %v235 = vunpack.c.l.b16 %v189
      %v236 = vunpack.c.h.b16 %v189
      %v237 = vunpack.c.l.b16 %v190
      %v238 = vunpack.c.h.b16 %v190
      %v239 = vunpack.c.l.b16 %v191
      %v240 = vunpack.c.h.b16 %v191
      %v241 = vunpack.c.l.b16 %v192
      %v242 = vunpack.c.h.b16 %v192
      %v243 = vpack.c.b16 %v229, %v227
      %v244 = vpack.c.b16 %v230, %v228
      %v245 = vpack.c.b16 %v233, %v231
      %v246 = vpack.c.b16 %v234, %v232
      %v247 = vpack.c.b16 %v237, %v235
      %v248 = vpack.c.b16 %v238, %v236
      %v249 = vpack.c.b16 %v241, %v239
      %v250 = vpack.c.b16 %v242, %v240
      %vm259 = vcmask 523264
      %v261 = vsel %vm259, %v215, 0
      %v264 = vsel %vm259, %v216, 0
      %v267 = vsel %vm259, %v217, 0
      %v270 = vsel %vm259, %v218, 0
      %272 = vmatpush.bf16.msra.mxu0 0
      %273 = vmatpush.bf16.msra.mxu0 0
      %274 = vmatpush.bf16.msra.mxu0 0
      %275 = vmatpush.bf16.msra.mxu0 0
      %276 = vmatpush.bf16.msra.mxu0 %v249
      %277 = vmatpush.bf16.msra.mxu0 %v247
      %278 = vmatpush.bf16.msra.mxu0 %v245
      %279 = vmatpush.bf16.msra.mxu0 %v243
      %280 = vmatmul.bf16.gmra.mxu0 %v261
      %v281 = vpop.f32.mrf.mxu0
      %v282 = vadd.f32 %v195, %v281
      %v283 = vpop.f32.mrf.mxu0
      %v284 = vadd.f32 %v195, %v283
      %285 = vmatmul.bf16.gmra.mxu0 %v264
      %v286 = vpop.f32.mrf.mxu0
      %v287 = vadd.f32 %v195, %v286
      %v288 = vpop.f32.mrf.mxu0
      %v289 = vadd.f32 %v195, %v288
      %290 = vmatmul.bf16.gmra.mxu0 %v267
      %v291 = vpop.f32.mrf.mxu0
      %v292 = vadd.f32 %v195, %v291
      %v293 = vpop.f32.mrf.mxu0
      %v294 = vadd.f32 %v195, %v293
      %295 = vmatmul.bf16.gmra.mxu0 %v270
      %v296 = vpop.f32.mrf.mxu0
      %v297 = vadd.f32 %v195, %v296
      %v298 = vpop.f32.mrf.mxu0
      %v299 = vadd.f32 %v195, %v298
      %300 = vdwg.mxu0
      %301 = vmatpush.bf16.msra.mxu0 0
      %302 = vmatpush.bf16.msra.mxu0 0
      %303 = vmatpush.bf16.msra.mxu0 0
      %304 = vmatpush.bf16.msra.mxu0 0
      %305 = vmatpush.bf16.msra.mxu0 %v250
      %306 = vmatpush.bf16.msra.mxu0 %v248
      %307 = vmatpush.bf16.msra.mxu0 %v246
      %308 = vmatpush.bf16.msra.mxu0 %v244
      %309 = vmatmul.bf16.gmra.mxu0 %v261
      %v310 = vpop.f32.mrf.mxu0
      %v311 = vadd.f32 %v196, %v310
      %v312 = vpop.f32.mrf.mxu0
      %v313 = vadd.f32 %v196, %v312
      %314 = vmatmul.bf16.gmra.mxu0 %v264
      %v315 = vpop.f32.mrf.mxu0
      %v316 = vadd.f32 %v196, %v315
      %v317 = vpop.f32.mrf.mxu0
      %v318 = vadd.f32 %v196, %v317
      %319 = vmatmul.bf16.gmra.mxu0 %v267
      %v320 = vpop.f32.mrf.mxu0
      %v321 = vadd.f32 %v196, %v320
      %v322 = vpop.f32.mrf.mxu0
      %v323 = vadd.f32 %v196, %v322
      %324 = vmatmul.bf16.gmra.mxu0 %v270
      %v325 = vpop.f32.mrf.mxu0
      %v326 = vadd.f32 %v196, %v325
      %v327 = vpop.f32.mrf.mxu0
      %v328 = vadd.f32 %v196, %v327
      %329 = vdwg.mxu0
      %330 = vst [vmem:[%s174] sm:$0xff] %v282
      %331 = vst [vmem:[%s174 + $0x8] sm:$0xff] %v311
      %332 = vst [vmem:[%s174 + $0x10] sm:$0xff] %v284
      %333 = vst [vmem:[%s174 + $0x18] sm:$0xff] %v313
      %334 = vst [vmem:[%s174 + $0x20] sm:$0xff] %v287
      %335 = vst [vmem:[%s174 + $0x28] sm:$0xff] %v316
      %336 = vst [vmem:[%s174 + $0x30] sm:$0xff] %v289
      %337 = vst [vmem:[%s174 + $0x38] sm:$0xff] %v318
      %338 = vst [vmem:[%s174 + $0x40] sm:$0xff] %v292
      %339 = vst [vmem:[%s174 + $0x48] sm:$0xff] %v321
      %340 = vst [vmem:[%s174 + $0x50] sm:$0xff] %v294
      %341 = vst [vmem:[%s174 + $0x58] sm:$0xff] %v323
      %342 = vst [vmem:[%s174 + $0x60] sm:$0xff] %v297
      %343 = vst [vmem:[%s174 + $0x68] sm:$0xff] %v326
      %344 = vst [vmem:[%s174 + $0x70] sm:$0xff] %v299
      %345 = vst [vmem:[%s174 + $0x78] sm:$0xff] %v328
      %s346 = smul.u32 8, %s14
      %p347 = scmp.lt.s32.totalorder %s346, 15
      %s348 = scalar_select %p347, %s346, 15
      %s349 = smul.addr %s348, 2
      %s350 = smul.addr %s349, 8
      %s351 = scalar_lea.vmem %s3, %s350
      // Predicated region
      $region33: #{lstm_head_forward.5} parent=31 // pred_check
        %p352 = pneg %p100
      $region34: #{lstm_head_forward.5} parent=31 // pred_check_branch
        %354 = sbr.rel (%p352) target = $region36
      $region35: #{lstm_head_forward.5} parent=31 // pred_region
        %s355 = smul.u32 8, %s14
      $region36: #{lstm_head_forward.5} parent=31 // pred_fallthru
        _
    $region32: #{lstm_head_forward.5} parent=5 // pred_fallthru
      _
    %p356 = scmp.le.s32.totalorder 2, %s9
    // Predicated region
    $region37: #{lstm_head_forward.5} parent=5 // pred_check
      %p357 = pneg %p356
    $region38: #{lstm_head_forward.5} parent=5 // pred_check_branch
      %359 = sbr.rel (%p357) target = $region40
    $region39: #{lstm_head_forward.5} parent=5 // pred_region
      %s360 = ssub.s32 %s9, 2
      // Predicated region
      $region41: #{lstm_head_forward.5} parent=39 // pred_check
        %p361 = pneg %p106
      $region42: #{lstm_head_forward.5} parent=39 // pred_check_branch
        %363 = sbr.rel (%p361) target = $region44
      $region43: #{lstm_head_forward.5} parent=39 // pred_region
        %s364 = smul.u32 8, %s15
        %p365 = scmp.lt.s32.totalorder %s364, 15
        %s366 = scalar_select %p365, %s364, 15
        %s367 = smul.addr %s366, 2
        %s368 = smul.addr %s367, 8
        %s369 = scalar_lea.vmem %s3, %s368
      $region44: #{lstm_head_forward.5} parent=39 // pred_fallthru
        _
    $region40: #{lstm_head_forward.5} parent=5 // pred_fallthru
      _
  $region6: #{lstm_head_forward.5} parent=0 // loop_footer
    %s13 = sadd.s32 1, %s9
  $region7: #{lstm_head_forward.5} parent=0 // loop_footer_branch
    %8 = sbr.rel target = $region3
  $region8: #{lstm_head_forward.5} parent=0 // loop_exit
    _

// kernel: lstm_head_forward.6
$region0: #{lstm_head_forward.6}
  #allocation0 [shape = 'u32[]', space=smem, size = 0x4, offset = 0x4, fixed_abs, tag = 'smem constant byte address 0x4 - core index']
  #allocation1 [shape = 'u32[72,128]{1,0:T(1,128)}', space=vmem, size = 0x9000, scoped, tag = 'internal scratch']
  %s0 = inlined_call_operand.vmem [shape: f32[64,2,256], index: 0, kind: input, shape index: {}]
  %s1 = inlined_call_operand.vmem [shape: bf16[64,256], index: 1, kind: input, shape index: {}]
  %s2 = inlined_call_operand.vmem [shape: f32[64,2,64], index: 2, kind: output, shape index: {}]
  %s3 = sld [smem:[#allocation0]]
  $region25: #{lstm_head_forward.6} parent=0
    _
  %s5 = ssub.s32 1, %s3
  %s6 = scalar_select 0, %s5, %s3
  // Predicated region
  $region2: #{lstm_head_forward.6} parent=0 // pred_check
    _
  $region3: #{lstm_head_forward.6} parent=0 // pred_check_branch
    %8 = sbr.rel (0) target = $region5
  $region4: #{lstm_head_forward.6} parent=0 // pred_region
    _
  $region5: #{lstm_head_forward.6} parent=0 // pred_fallthru
    _
  // Predicated region
  $region6: #{lstm_head_forward.6} parent=0 // pred_check
    _
  $region7: #{lstm_head_forward.6} parent=0 // pred_check_branch
    %10 = sbr.rel (0) target = $region9
  $region8: #{lstm_head_forward.6} parent=0 // pred_region
    _
  $region9: #{lstm_head_forward.6} parent=0 // pred_fallthru
    _
  loop: start=0, step=1, limit=64
  $region10: #{lstm_head_forward.6} parent=0 // loop_pre_header
    _
  $region11: #{lstm_head_forward.6} parent=0 // loop_header
    %s13 = sphi 0, %s17
    %p14 = scmp.ge.s32.totalorder %s13, 64
    %v18 = vphi 0.0, %v217
    %v19 = vphi 0.0, %v224
  $region12: #{lstm_head_forward.6} parent=0 // loop_header_branch
    %16 = sbr.rel (%p14) target = $region16
  $region13: #{lstm_head_forward.6} parent=0 // loop_body
    %v20 = vpack.c.bf16 %v18, %v18
    %v21 = vld [vmem:[%s1] sm:$0xff]
    %v22 = vld [vmem:[%s1 + $0x8] sm:$0xff]
    %v23 = vld [vmem:[%s1 + $0x10] sm:$0xff]
    %v24 = vld [vmem:[%s1 + $0x18] sm:$0xff]
    %v25 = vld [vmem:[%s1 + $0x20] sm:$0xff]
    %v26 = vld [vmem:[%s1 + $0x28] sm:$0xff]
    %v27 = vld [vmem:[%s1 + $0x30] sm:$0xff]
    %v28 = vld [vmem:[%s1 + $0x38] sm:$0xff]
    %v37 = vunpack.c.l.b16 %v21
    %v38 = vunpack.c.h.b16 %v21
    %v39 = vunpack.c.l.b16 %v22
    %v40 = vunpack.c.h.b16 %v22
    %v41 = vunpack.c.l.b16 %v23
    %v42 = vunpack.c.h.b16 %v23
    %v43 = vunpack.c.l.b16 %v24
    %v44 = vunpack.c.h.b16 %v24
    %v45 = vunpack.c.l.b16 %v25
    %v46 = vunpack.c.h.b16 %v25
    %v47 = vunpack.c.l.b16 %v26
    %v48 = vunpack.c.h.b16 %v26
    %v49 = vunpack.c.l.b16 %v27
    %v50 = vunpack.c.h.b16 %v27
    %v51 = vunpack.c.l.b16 %v28
    %v52 = vunpack.c.h.b16 %v28
    %v53 = vpack.c.b16 %v39, %v37
    %v54 = vpack.c.b16 %v40, %v38
    %v55 = vpack.c.b16 %v43, %v41
    %v56 = vpack.c.b16 %v44, %v42
    %v57 = vpack.c.b16 %v47, %v45
    %v58 = vpack.c.b16 %v48, %v46
    %v59 = vpack.c.b16 %v51, %v49
    %v60 = vpack.c.b16 %v52, %v50
    %vm69 = vcmask 523264
    %v71 = vsel %vm69, %v20, 0
    %73 = vmatpush.bf16.msra.mxu0 0
    %74 = vmatpush.bf16.msra.mxu0 0
    %75 = vmatpush.bf16.msra.mxu0 0
    %76 = vmatpush.bf16.msra.mxu0 0
    %77 = vmatpush.bf16.msra.mxu0 %v59
    %78 = vmatpush.bf16.msra.mxu0 %v57
    %79 = vmatpush.bf16.msra.mxu0 %v55
    %80 = vmatpush.bf16.msra.mxu0 %v53
    %81 = vmatmul.bf16.gmra.mxu0 %v71
    %v82 = vpop.f32.mrf.mxu0
    %v83 = vadd.f32 0.0, %v82
    %v84 = vpop.f32.mrf.mxu0
    %85 = vdwg.mxu0
    %86 = vmatpush.bf16.msra.mxu0 0
    %87 = vmatpush.bf16.msra.mxu0 0
    %88 = vmatpush.bf16.msra.mxu0 0
    %89 = vmatpush.bf16.msra.mxu0 0
    %90 = vmatpush.bf16.msra.mxu0 %v60
    %91 = vmatpush.bf16.msra.mxu0 %v58
    %92 = vmatpush.bf16.msra.mxu0 %v56
    %93 = vmatpush.bf16.msra.mxu0 %v54
    %94 = vmatmul.bf16.gmra.mxu0 %v71
    %v95 = vpop.f32.mrf.mxu0
    %v96 = vadd.f32 0.0, %v95
    %v97 = vpop.f32.mrf.mxu0
    %98 = vdwg.mxu0
    %s99 = smul.u32 %s13, 2
    %s100 = smul.addr %s99, 2
    %s101 = scalar_lea.vmem %s0, %s100
    %v102 = vld [vmem:[%s101] sm:$0x3]
    %v103 = vadd.f32 %v102, %v83
    %v104 = vxor.u32 %v103, 2147483648
    %v105 = vmul.f32 %v104, 1.442695
    %v106 = vpow.pop %v105
    %v107 = vadd.f32 %v106, 1.0
    %v108 = vrcp.pop %v107
    %v109 = vmul.f32 %v107, %v108
    %v110 = vsub.f32 1.0, %v109
    %v111 = vmul.f32 %v108, %v110
    %v112 = vadd.f32 %v108, %v111
    %vm113 = vweird.f32 %v107
    %vm114 = vweird.f32 %v108
    %vm115 = vmor %vm113, %vm114
    %v116 = vsel %vm115, %v108, %v112
    %v117 = vand.u32 2147483647, %v107
    %vm118 = vcmp.eq.f32.partialorder %v117, 8.507059e+37
    %v119 = vand.u32 %v107, 2147483648
    %v120 = vor.u32 1.1754944e-38, %v119
    %v121 = vsel %vm118, %v120, %v116
    %v122 = vmul.f32 1.0, %v121
    %v123 = vtanh.pop %v103
    %125 = vrot.lane.b32.xlu0 %v19, 32
    %v126 = vpop.permute.xlu0 %125
    %v128 = vmul.f32 %v122, %v126
    %130 = vrot.lane.b32.xlu0 %v123, 64
    %v131 = vpop.permute.xlu0 %130
    %v133 = vmul.f32 %v122, %v131
    %135 = vrot.lane.b32.xlu0 %v133, 32
    %v136 = vpop.permute.xlu0 %135
    %v138 = vadd.f32 %v128, %v136
    %v139 = vtanh.pop %v138
    %141 = vrot.lane.b32.xlu0 %v139, 64
    %v142 = vpop.permute.xlu0 %141
    %v144 = vmul.f32 %v122, %v142
    %146 = vst [vmem:[#allocation1] ss:$4 sm:$0xff] %v144
    %v147 = vld.sshfl [vmem:[#allocation1] sm:$0xff pattern:$0x73625140]
    %148 = vrot.lane.b32.xlu0 %v147, 32
    %v149 = vpop.permute.xlu0 %148
    %s151 = scalar_lea.vmem %s2, %s99
    %vm152 = vcmask 254976
    %153 = vst.msk [vmem:[%s151] sm:$0x3] %vm152, %v149
    %s154 = ssub.s32 63, %s13
    %s155 = smul.u32 %s154, 2
    %s156 = smul.addr %s155, 2
    %s157 = scalar_lea.vmem %s0, %s156
    %v158 = vld [vmem:[%s157 + $0x2] sm:$0x3]
    %v159 = vadd.f32 %v158, %v96
    %v160 = vxor.u32 %v159, 2147483648
    %v161 = vmul.f32 %v160, 1.442695
    %v162 = vpow.pop %v161
    %v163 = vadd.f32 %v162, 1.0
    %v164 = vrcp.pop %v163
    %v165 = vmul.f32 %v163, %v164
    %v166 = vsub.f32 1.0, %v165
    %v167 = vmul.f32 %v164, %v166
    %v168 = vadd.f32 %v164, %v167
    %vm169 = vweird.f32 %v163
    %vm170 = vweird.f32 %v164
    %vm171 = vmor %vm169, %vm170
    %v172 = vsel %vm171, %v164, %v168
    %v173 = vand.u32 2147483647, %v163
    %vm174 = vcmp.eq.f32.partialorder %v173, 8.507059e+37
    %v175 = vand.u32 %v163, 2147483648
    %v176 = vor.u32 1.1754944e-38, %v175
    %v177 = vsel %vm174, %v176, %v172
    %v178 = vmul.f32 1.0, %v177
    %v179 = vtanh.pop %v159
    %v180 = vmul.f32 %v178, %v19
    %182 = vrot.lane.b32.xlu0 %v179, 64
    %v183 = vpop.permute.xlu0 %182
    %v185 = vmul.f32 %v178, %v183
    %187 = vrot.lane.b32.xlu0 %v185, 32
    %v188 = vpop.permute.xlu0 %187
    %v190 = vadd.f32 %v180, %v188
    %v191 = vtanh.pop %v190
    %193 = vrot.lane.b32.xlu0 %v191, 64
    %v194 = vpop.permute.xlu0 %193
    %v196 = vmul.f32 %v178, %v194
    %198 = vst [vmem:[#allocation1] ss:$4 sm:$0xff] %v196
    %v199 = vld.sshfl [vmem:[#allocation1] sm:$0xff pattern:$0x73625140]
    %200 = vrot.lane.b32.xlu0 %v199, 64
    %v201 = vpop.permute.xlu0 %200
    %s203 = scalar_lea.vmem %s2, %s155
    %vm204 = vcmask 517376
    %205 = vst.msk [vmem:[%s203] sm:$0x3] %vm204, %v201
    %206 = vst [vmem:[#allocation1] ss:$4 sm:$0xff] %v144
    %v207 = vld.sshfl [vmem:[#allocation1] sm:$0xff pattern:$0x73625140]
    %208 = vrot.lane.b32.xlu0 %v207, 32
    %v209 = vpop.permute.xlu0 %208
    %211 = vst [vmem:[#allocation1] ss:$4 sm:$0xff] %v196
    %v212 = vld.sshfl [vmem:[#allocation1] sm:$0xff pattern:$0x73625140]
    %213 = vrot.lane.b32.xlu0 %v212, 64
    %v214 = vpop.permute.xlu0 %213
    %vm216 = vcmask 261120
    %v217 = vsel %vm216, %v209, %v214
    %219 = vst [vmem:[#allocation1] ss:$4 sm:$0xff] %v138
    %v220 = vld.sshfl [vmem:[#allocation1] sm:$0xff pattern:$0x73625140]
    %221 = vrot.lane.b32.xlu0 %v220, 96
    %v222 = vpop.permute.xlu0 %221
    %v224 = vsel %vm216, %v222, %v190
  $region14: #{lstm_head_forward.6} parent=0 // loop_footer
    %s17 = sadd.s32 1, %s13
  $region15: #{lstm_head_forward.6} parent=0 // loop_footer_branch
    %12 = sbr.rel target = $region11
  $region16: #{lstm_head_forward.6} parent=0 // loop_exit
    _
  // Predicated region
  $region17: #{lstm_head_forward.6} parent=0 // pred_check
    _
  $region18: #{lstm_head_forward.6} parent=0 // pred_check_branch
    %226 = sbr.rel (0) target = $region20
  $region19: #{lstm_head_forward.6} parent=0 // pred_region
    _
  $region20: #{lstm_head_forward.6} parent=0 // pred_fallthru
    _
  // Predicated region
  $region21: #{lstm_head_forward.6} parent=0 // pred_check
    _
  $region22: #{lstm_head_forward.6} parent=0 // pred_check_branch
    %228 = sbr.rel (0) target = $region24
  $region23: #{lstm_head_forward.6} parent=0 // pred_region
    _
  $region24: #{lstm_head_forward.6} parent=0 // pred_fallthru
    _

// kernel: lstm_head_forward.9
$region0: #{lstm_head_forward.9}
  #allocation0 [shape = 'u32[]', space=smem, size = 0x4, offset = 0x4, fixed_abs, tag = 'smem constant byte address 0x4 - core index']
  #allocation1 [shape = 'u32[72,128]{1,0:T(1,128)}', space=vmem, size = 0x9000, scoped, tag = 'internal scratch']
  %s0 = inlined_call_operand.vmem [shape: f32[2,66,64], index: 0, kind: input, shape index: {}]
  %s1 = inlined_call_operand.vmem [shape: f32[3,64,64], index: 1, kind: input, shape index: {}]
  %s2 = inlined_call_operand.vmem [shape: f32[1,64], index: 2, kind: input, shape index: {}]
  %s3 = inlined_call_operand.vmem [shape: f32[64,128], index: 3, kind: input, shape index: {}]
  %s4 = inlined_call_operand.vmem [shape: f32[1,128], index: 4, kind: input, shape index: {}]
  %s5 = inlined_call_operand.vmem [shape: f32[2,64,128], index: 5, kind: output, shape index: {}]
  %s6 = sld [smem:[#allocation0]]
  $region53: #{lstm_head_forward.9} parent=0
    _
  %s8 = ssub.s32 1, %s6
  %s9 = scalar_select 0, %s8, %s6
  loop: start=0, step=1, limit=4
  $region2: #{lstm_head_forward.9} parent=0 // loop_pre_header
    _
  $region3: #{lstm_head_forward.9} parent=0 // loop_header
    %s11 = sphi 0, %s15
    %p12 = scmp.ge.s32.totalorder %s11, 4
    %s21 = sphi 0, %s23
    %s24 = sphi 0, %s21
    %s25 = sphi 0, %s24
    %s41 = sphi 0, %s25
    %s45 = sphi 0, %s45
    %s47 = sphi 0, %s45
    %s48 = sphi 0, %s47
    %s62 = sphi 0, %s48
    %s66 = sphi 0, %s66
    %s68 = sphi 0, %s66
    %s69 = sphi 0, %s68
    %s83 = sphi 0, %s69
    %s87 = sphi 0, %s87
    %s89 = sphi 0, %s87
    %s90 = sphi 0, %s89
    %s104 = sphi 0, %s90
    %s108 = sphi 0, %s108
    %s110 = sphi 0, %s108
    %s111 = sphi 0, %s110
    %s125 = sphi 0, %s111
    %s131 = sphi 0, %s133
    %s134 = sphi 0, %s131
    %s135 = sphi 0, %s134
    %s151 = sphi 0, %s135
  $region4: #{lstm_head_forward.9} parent=0 // loop_header_branch
    %14 = sbr.rel (%p12) target = $region8
  $region5: #{lstm_head_forward.9} parent=0 // loop_body
    %s16 = ssub.s32 %s11, 1
    %s17 = ssub.s32 %s11, 2
    %s18 = sadd.s32 %s11, 1
    %s19 = ssub.s32 %s11, %s18
    %p20 = scmp.eq.s32.totalorder %s19, 0
    %s22 = sadd.s32 %s21, 1
    %s23 = scalar_select %p20, %s21, %s22
    %p26 = pneg %p20
    %p27 = scmp.eq.s32.totalorder %s11, 1
    %p28 = por %p26, %p27
    %p29 = scmp.ne.s32.totalorder %s21, %s24
    %p30 = scmp.eq.s32.totalorder %s11, 0
    %p31 = por %p29, %p30
    %p32 = scmp.ne.s32.totalorder %s21, %s24
    %p33 = scmp.eq.s32.totalorder %s16, 1
    %p34 = por %p32, %p33
    %p35 = scmp.ne.s32.totalorder %s24, %s25
    %p36 = scmp.eq.s32.totalorder %s16, 0
    %p37 = por %p35, %p36
    %p38 = scmp.ne.s32.totalorder %s24, %s25
    %p39 = scmp.eq.s32.totalorder %s17, 1
    %p40 = por %p38, %p39
    %p42 = scmp.ne.s32.totalorder %s25, %s41
    %p43 = scmp.eq.s32.totalorder %s17, 0
    %p44 = por %p42, %p43
    %s46 = sadd.s32 %s45, 1
    %p49 = scmp.eq.s32.totalorder %s11, 1
    %p50 = scmp.ne.s32.totalorder %s45, %s47
    %p51 = scmp.eq.s32.totalorder %s11, 0
    %p52 = por %p50, %p51
    %p53 = scmp.ne.s32.totalorder %s45, %s47
    %p54 = scmp.eq.s32.totalorder %s16, 1
    %p55 = por %p53, %p54
    %p56 = scmp.ne.s32.totalorder %s47, %s48
    %p57 = scmp.eq.s32.totalorder %s16, 0
    %p58 = por %p56, %p57
    %p59 = scmp.ne.s32.totalorder %s47, %s48
    %p60 = scmp.eq.s32.totalorder %s17, 1
    %p61 = por %p59, %p60
    %p63 = scmp.ne.s32.totalorder %s48, %s62
    %p64 = scmp.eq.s32.totalorder %s17, 0
    %p65 = por %p63, %p64
    %s67 = sadd.s32 %s66, 1
    %p70 = scmp.eq.s32.totalorder %s11, 1
    %p71 = scmp.ne.s32.totalorder %s66, %s68
    %p72 = scmp.eq.s32.totalorder %s11, 0
    %p73 = por %p71, %p72
    %p74 = scmp.ne.s32.totalorder %s66, %s68
    %p75 = scmp.eq.s32.totalorder %s16, 1
    %p76 = por %p74, %p75
    %p77 = scmp.ne.s32.totalorder %s68, %s69
    %p78 = scmp.eq.s32.totalorder %s16, 0
    %p79 = por %p77, %p78
    %p80 = scmp.ne.s32.totalorder %s68, %s69
    %p81 = scmp.eq.s32.totalorder %s17, 1
    %p82 = por %p80, %p81
    %p84 = scmp.ne.s32.totalorder %s69, %s83
    %p85 = scmp.eq.s32.totalorder %s17, 0
    %p86 = por %p84, %p85
    %s88 = sadd.s32 %s87, 1
    %p91 = scmp.eq.s32.totalorder %s11, 1
    %p92 = scmp.ne.s32.totalorder %s87, %s89
    %p93 = scmp.eq.s32.totalorder %s11, 0
    %p94 = por %p92, %p93
    %p95 = scmp.ne.s32.totalorder %s87, %s89
    %p96 = scmp.eq.s32.totalorder %s16, 1
    %p97 = por %p95, %p96
    %p98 = scmp.ne.s32.totalorder %s89, %s90
    %p99 = scmp.eq.s32.totalorder %s16, 0
    %p100 = por %p98, %p99
    %p101 = scmp.ne.s32.totalorder %s89, %s90
    %p102 = scmp.eq.s32.totalorder %s17, 1
    %p103 = por %p101, %p102
    %p105 = scmp.ne.s32.totalorder %s90, %s104
    %p106 = scmp.eq.s32.totalorder %s17, 0
    %p107 = por %p105, %p106
    %s109 = sadd.s32 %s108, 1
    %p112 = scmp.eq.s32.totalorder %s11, 1
    %p113 = scmp.ne.s32.totalorder %s108, %s110
    %p114 = scmp.eq.s32.totalorder %s11, 0
    %p115 = por %p113, %p114
    %p116 = scmp.ne.s32.totalorder %s108, %s110
    %p117 = scmp.eq.s32.totalorder %s16, 1
    %p118 = por %p116, %p117
    %p119 = scmp.ne.s32.totalorder %s110, %s111
    %p120 = scmp.eq.s32.totalorder %s16, 0
    %p121 = por %p119, %p120
    %p122 = scmp.ne.s32.totalorder %s110, %s111
    %p123 = scmp.eq.s32.totalorder %s17, 1
    %p124 = por %p122, %p123
    %p126 = scmp.ne.s32.totalorder %s111, %s125
    %p127 = scmp.eq.s32.totalorder %s17, 0
    %p128 = por %p126, %p127
    %s129 = ssub.s32 %s11, %s18
    %p130 = scmp.eq.s32.totalorder %s129, 0
    %s132 = sadd.s32 %s131, 1
    %s133 = scalar_select %p130, %s131, %s132
    %p136 = pneg %p130
    %p137 = scmp.eq.s32.totalorder %s11, 1
    %p138 = por %p136, %p137
    %p139 = scmp.ne.s32.totalorder %s131, %s134
    %p140 = scmp.eq.s32.totalorder %s11, 0
    %p141 = por %p139, %p140
    %p142 = scmp.ne.s32.totalorder %s131, %s134
    %p143 = scmp.eq.s32.totalorder %s16, 1
    %p144 = por %p142, %p143
    %p145 = scmp.ne.s32.totalorder %s134, %s135
    %p146 = scmp.eq.s32.totalorder %s16, 0
    %p147 = por %p145, %p146
    %p148 = scmp.ne.s32.totalorder %s134, %s135
    %p149 = scmp.eq.s32.totalorder %s17, 1
    %p150 = por %p148, %p149
    %p152 = scmp.ne.s32.totalorder %s135, %s151
    %p153 = scmp.eq.s32.totalorder %s17, 0
    %p154 = por %p152, %p153
    %p155 = scmp.le.s32.totalorder 1, %s11
    %p156 = scmp.lt.s32.totalorder %s11, 3
    %p157 = pnand %p155, %p156
    %p158 = pneg %p157
    // Predicated region
    $region9: #{lstm_head_forward.9} parent=5 // pred_check
      _
    $region10: #{lstm_head_forward.9} parent=5 // pred_check_branch
      %160 = sbr.rel (%p157) target = $region12
    $region11: #{lstm_head_forward.9} parent=5 // pred_region
      %s161 = ssub.s32 %s11, 1
      // Predicated region
      $region13: #{lstm_head_forward.9} parent=11 // pred_check
        %p162 = pneg %p58
      $region14: #{lstm_head_forward.9} parent=11 // pred_check_branch
        %164 = sbr.rel (%p162) target = $region16
      $region15: #{lstm_head_forward.9} parent=11 // pred_region
        _
      $region16: #{lstm_head_forward.9} parent=11 // pred_fallthru
        _
      // Predicated region
      $region17: #{lstm_head_forward.9} parent=11 // pred_check
        %p165 = pneg %p79
      $region18: #{lstm_head_forward.9} parent=11 // pred_check_branch
        %167 = sbr.rel (%p165) target = $region20
      $region19: #{lstm_head_forward.9} parent=11 // pred_region
        _
      $region20: #{lstm_head_forward.9} parent=11 // pred_fallthru
        _
      // Predicated region
      $region21: #{lstm_head_forward.9} parent=11 // pred_check
        %p168 = pneg %p100
      $region22: #{lstm_head_forward.9} parent=11 // pred_check_branch
        %170 = sbr.rel (%p168) target = $region24
      $region23: #{lstm_head_forward.9} parent=11 // pred_region
        _
      $region24: #{lstm_head_forward.9} parent=11 // pred_fallthru
        _
      // Predicated region
      $region25: #{lstm_head_forward.9} parent=11 // pred_check
        %p171 = pneg %p121
      $region26: #{lstm_head_forward.9} parent=11 // pred_check_branch
        %173 = sbr.rel (%p171) target = $region28
      $region27: #{lstm_head_forward.9} parent=11 // pred_region
        _
      $region28: #{lstm_head_forward.9} parent=11 // pred_fallthru
        _
    $region12: #{lstm_head_forward.9} parent=5 // pred_fallthru
      _
    %p174 = scmp.lt.s32.totalorder %s11, 2
    // Predicated region
    $region29: #{lstm_head_forward.9} parent=5 // pred_check
      %p175 = pneg %p174
    $region30: #{lstm_head_forward.9} parent=5 // pred_check_branch
      %177 = sbr.rel (%p175) target = $region32
    $region31: #{lstm_head_forward.9} parent=5 // pred_region
      // Predicated region
      $region33: #{lstm_head_forward.9} parent=31 // pred_check
        %p178 = pneg %p31
      $region34: #{lstm_head_forward.9} parent=31 // pred_check_branch
        %180 = sbr.rel (%p178) target = $region36
      $region35: #{lstm_head_forward.9} parent=31 // pred_region
        %p181 = scmp.lt.s32.totalorder %s11, 1
        %s182 = scalar_select %p181, %s11, 1
        %s183 = smul.addr %s182, 9
        %s184 = smul.addr %s183, 8
        %s185 = scalar_lea.vmem %s0, %s184
      $region36: #{lstm_head_forward.9} parent=31 // pred_fallthru
        _
    $region32: #{lstm_head_forward.9} parent=5 // pred_fallthru
      _
    %p186 = scmp.le.s32.totalorder 1, %s11
    %p187 = scmp.lt.s32.totalorder %s11, 3
    %p188 = pnand %p186, %p187
    %p189 = pneg %p188
    // Predicated region
    $region37: #{lstm_head_forward.9} parent=5 // pred_check
      _
    $region38: #{lstm_head_forward.9} parent=5 // pred_check_branch
      %191 = sbr.rel (%p188) target = $region40
    $region39: #{lstm_head_forward.9} parent=5 // pred_region
      %s192 = ssub.s32 %s11, 1
      %p193 = scmp.lt.s32.totalorder %s16, 1
      %s194 = scalar_select %p193, %s16, 1
      %s195 = smul.addr %s194, 9
      %s196 = smul.addr %s195, 8
      %s197 = scalar_lea.vmem %s0, %s196
      %p198 = pneg %p37
      %p199 = pneg %p34
      %p200 = pneg %p58
      %p201 = pneg %p55
      %p202 = pneg %p79
      %p203 = pneg %p76
      %p204 = pneg %p100
      %p205 = pneg %p97
      %p206 = pneg %p121
      %p207 = pneg %p118
      %p208 = pneg %p147
      %p209 = pneg %p144
      %p210 = scmp.lt.s32.totalorder %s16, 1
      %s211 = scalar_select %p210, %s16, 1
      %s212 = smul.addr %s211, 8
      %s213 = smul.addr %s212, 8
      %s214 = scalar_lea.vmem %s5, %s213
      %p215 = scmp.lt.s32.totalorder %s16, 1
      %s216 = scalar_select %p215, %s16, 1
      %s217 = smul.addr %s216, 9
      %s218 = smul.addr %s217, 8
      %s219 = scalar_lea.vmem %s0, %s218
      %p220 = scmp.lt.s32.totalorder %s16, 1
      %s221 = scalar_select %p220, %s16, 1
      %s222 = smul.addr %s221, 8
      %s223 = smul.addr %s222, 8
      %s224 = scalar_lea.vmem %s5, %s223
      %v225 = vld [vmem:[%s219] sm:$0xff]
      %v226 = vld [vmem:[%s219 + $0x8] sm:$0xff]
      %v227 = vld [vmem:[%s219 + $0x10] sm:$0xff]
      %v228 = vld [vmem:[%s219 + $0x18] sm:$0xff]
      %v229 = vld [vmem:[%s219 + $0x20] sm:$0xff]
      %v230 = vld [vmem:[%s219 + $0x28] sm:$0xff]
      %v231 = vld [vmem:[%s219 + $0x30] sm:$0xff]
      %v232 = vld [vmem:[%s219 + $0x38] sm:$0xff]
      %v233 = vld [vmem:[%s219 + $0x40] sm:$0x3]
      %v234 = vld [vmem:[%s1] sm:$0xff]
      %v235 = vld [vmem:[%s1 + $0x8] sm:$0xff]
      %v236 = vld [vmem:[%s1 + $0x10] sm:$0xff]
      %v237 = vld [vmem:[%s1 + $0x18] sm:$0xff]
      %v238 = vld [vmem:[%s1 + $0x20] sm:$0xff]
      %v239 = vld [vmem:[%s1 + $0x28] sm:$0xff]
      %v240 = vld [vmem:[%s1 + $0x30] sm:$0xff]
      %v241 = vld [vmem:[%s1 + $0x38] sm:$0xff]
      %s242 = scalar_lea.vmem %s1, 64
      %v243 = vld [vmem:[%s242] sm:$0xff]
      %v244 = vld [vmem:[%s242 + $0x8] sm:$0xff]
      %v245 = vld [vmem:[%s242 + $0x10] sm:$0xff]
      %v246 = vld [vmem:[%s242 + $0x18] sm:$0xff]
      %v247 = vld [vmem:[%s242 + $0x20] sm:$0xff]
      %v248 = vld [vmem:[%s242 + $0x28] sm:$0xff]
      %v249 = vld [vmem:[%s242 + $0x30] sm:$0xff]
      %v250 = vld [vmem:[%s242 + $0x38] sm:$0xff]
      %vm260 = vcmask 1046528
      %v261 = vrot.slane %v225, 1
      %v262 = vrot.slane %v226, 1
      %v263 = vsel %vm260, %v261, %v262
      %v264 = vrot.slane %v227, 1
      %v265 = vsel %vm260, %v262, %v264
      %v266 = vrot.slane %v228, 1
      %v267 = vsel %vm260, %v264, %v266
      %v268 = vrot.slane %v229, 1
      %v269 = vsel %vm260, %v266, %v268
      %v270 = vrot.slane %v230, 1
      %v271 = vsel %vm260, %v268, %v270
      %v272 = vrot.slane %v231, 1
      %v273 = vsel %vm260, %v270, %v272
      %v274 = vrot.slane %v232, 1
      %v275 = vsel %vm260, %v272, %v274
      %v276 = vrot.slane %v233, 1
      %v277 = vsel %vm260, %v274, %v276
      %vm278 = vcmask 523264
      %v279 = vsel %vm278, %v263, 0
      %v281 = vsel %vm278, %v265, 0
      %v283 = vsel %vm278, %v267, 0
      %v285 = vsel %vm278, %v269, 0
      %v287 = vsel %vm278, %v271, 0
      %v289 = vsel %vm278, %v273, 0
      %v291 = vsel %vm278, %v275, 0
      %v293 = vsel %vm278, %v277, 0
      %295 = vmatpush.msra.mxu0 0.0
      %296 = vmatpush.msra.mxu0 0.0
      %297 = vmatpush.msra.mxu0 0.0
      %298 = vmatpush.msra.mxu0 0.0
      %299 = vmatpush.msra.mxu0 0.0
      %300 = vmatpush.msra.mxu0 0.0
      %301 = vmatpush.msra.mxu0 0.0
      %302 = vmatpush.msra.mxu0 0.0
      %303 = vmatpush.msra.mxu0 %v250
      %304 = vmatpush.msra.mxu0 %v249
      %305 = vmatpush.msra.mxu0 %v248
      %306 = vmatpush.msra.mxu0 %v247
      %307 = vmatpush.msra.mxu0 %v246
      %308 = vmatpush.msra.mxu0 %v245
      %309 = vmatpush.msra.mxu0 %v244
      %310 = vmatpush.msra.mxu0 %v243
      %311 = vmatmul.f32.gmra.mxu0 %v279
      %v312 = vpop.f32.mrf.mxu0
      %v313 = vadd.f32 0.0, %v312
      %314 = vmatmul.f32.gmra.mxu0 %v281
      %v315 = vpop.f32.mrf.mxu0
      %v316 = vadd.f32 0.0, %v315
      %317 = vmatmul.f32.gmra.mxu0 %v283
      %v318 = vpop.f32.mrf.mxu0
      %v319 = vadd.f32 0.0, %v318
      %320 = vmatmul.f32.gmra.mxu0 %v285
      %v321 = vpop.f32.mrf.mxu0
      %v322 = vadd.f32 0.0, %v321
      %323 = vmatmul.f32.gmra.mxu0 %v287
      %v324 = vpop.f32.mrf.mxu0
      %v325 = vadd.f32 0.0, %v324
      %326 = vmatmul.f32.gmra.mxu0 %v289
      %v327 = vpop.f32.mrf.mxu0
      %v328 = vadd.f32 0.0, %v327
      %329 = vmatmul.f32.gmra.mxu0 %v291
      %v330 = vpop.f32.mrf.mxu0
      %v331 = vadd.f32 0.0, %v330
      %332 = vmatmul.f32.gmra.mxu0 %v293
      %v333 = vpop.f32.mrf.mxu0
      %v334 = vadd.f32 0.0, %v333
      %335 = vdwg.mxu0
      %v336 = vsel %vm278, %v225, 0
      %v338 = vsel %vm278, %v226, 0
      %v340 = vsel %vm278, %v227, 0
      %v342 = vsel %vm278, %v228, 0
      %v344 = vsel %vm278, %v229, 0
      %v346 = vsel %vm278, %v230, 0
      %v348 = vsel %vm278, %v231, 0
      %v350 = vsel %vm278, %v232, 0
      %352 = vmatpush.msra.mxu0 0.0
      %353 = vmatpush.msra.mxu0 0.0
      %354 = vmatpush.msra.mxu0 0.0
      %355 = vmatpush.msra.mxu0 0.0
      %356 = vmatpush.msra.mxu0 0.0
      %357 = vmatpush.msra.mxu0 0.0
      %358 = vmatpush.msra.mxu0 0.0
      %359 = vmatpush.msra.mxu0 0.0
      %360 = vmatpush.msra.mxu0 %v241
      %361 = vmatpush.msra.mxu0 %v240
      %362 = vmatpush.msra.mxu0 %v239
      %363 = vmatpush.msra.mxu0 %v238
      %364 = vmatpush.msra.mxu0 %v237
      %365 = vmatpush.msra.mxu0 %v236
      %366 = vmatpush.msra.mxu0 %v235
      %367 = vmatpush.msra.mxu0 %v234
      %368 = vmatmul.f32.gmra.mxu0 %v336
      %v369 = vpop.f32.mrf.mxu0
      %v370 = vadd.f32 %v313, %v369
      %371 = vmatmul.f32.gmra.mxu0 %v338
      %v372 = vpop.f32.mrf.mxu0
      %v373 = vadd.f32 %v316, %v372
      %374 = vmatmul.f32.gmra.mxu0 %v340
      %v375 = vpop.f32.mrf.mxu0
      %v376 = vadd.f32 %v319, %v375
      %377 = vmatmul.f32.gmra.mxu0 %v342
      %v378 = vpop.f32.mrf.mxu0
      %v379 = vadd.f32 %v322, %v378
      %380 = vmatmul.f32.gmra.mxu0 %v344
      %v381 = vpop.f32.mrf.mxu0
      %v382 = vadd.f32 %v325, %v381
      %383 = vmatmul.f32.gmra.mxu0 %v346
      %v384 = vpop.f32.mrf.mxu0
      %v385 = vadd.f32 %v328, %v384
      %386 = vmatmul.f32.gmra.mxu0 %v348
      %v387 = vpop.f32.mrf.mxu0
      %v388 = vadd.f32 %v331, %v387
      %389 = vmatmul.f32.gmra.mxu0 %v350
      %v390 = vpop.f32.mrf.mxu0
      %v391 = vadd.f32 %v334, %v390
      %392 = vdwg.mxu0
      %s393 = scalar_lea.vmem %s1, 128
      %v394 = vld [vmem:[%s393] sm:$0xff]
      %v395 = vld [vmem:[%s393 + $0x8] sm:$0xff]
      %v396 = vld [vmem:[%s393 + $0x10] sm:$0xff]
      %v397 = vld [vmem:[%s393 + $0x18] sm:$0xff]
      %v398 = vld [vmem:[%s393 + $0x20] sm:$0xff]
      %v399 = vld [vmem:[%s393 + $0x28] sm:$0xff]
      %v400 = vld [vmem:[%s393 + $0x30] sm:$0xff]
      %v401 = vld [vmem:[%s393 + $0x38] sm:$0xff]
      %vm402 = vcmask 1045504
      %v403 = vrot.slane %v225, 2
      %v404 = vrot.slane %v226, 2
      %v405 = vsel %vm402, %v403, %v404
      %v406 = vrot.slane %v227, 2
      %v407 = vsel %vm402, %v404, %v406
      %v408 = vrot.slane %v228, 2
      %v409 = vsel %vm402, %v406, %v408
      %v410 = vrot.slane %v229, 2
      %v411 = vsel %vm402, %v408, %v410
      %v412 = vrot.slane %v230, 2
      %v413 = vsel %vm402, %v410, %v412
      %v414 = vrot.slane %v231, 2
      %v415 = vsel %vm402, %v412, %v414
      %v416 = vrot.slane %v232, 2
      %v417 = vsel %vm402, %v414, %v416
      %v418 = vrot.slane %v233, 2
      %v419 = vsel %vm402, %v416, %v418
      %v420 = vsel %vm278, %v405, 0
      %v422 = vsel %vm278, %v407, 0
      %v424 = vsel %vm278, %v409, 0
      %v426 = vsel %vm278, %v411, 0
      %v428 = vsel %vm278, %v413, 0
      %v430 = vsel %vm278, %v415, 0
      %v432 = vsel %vm278, %v417, 0
      %v434 = vsel %vm278, %v419, 0
      %436 = vmatpush.msra.mxu0 0.0
      %437 = vmatpush.msra.mxu0 0.0
      %438 = vmatpush.msra.mxu0 0.0
      %439 = vmatpush.msra.mxu0 0.0
      %440 = vmatpush.msra.mxu0 0.0
      %441 = vmatpush.msra.mxu0 0.0
      %442 = vmatpush.msra.mxu0 0.0
      %443 = vmatpush.msra.mxu0 0.0
      %444 = vmatpush.msra.mxu0 %v401
      %445 = vmatpush.msra.mxu0 %v400
      %446 = vmatpush.msra.mxu0 %v399
      %447 = vmatpush.msra.mxu0 %v398
      %448 = vmatpush.msra.mxu0 %v397
      %449 = vmatpush.msra.mxu0 %v396
      %450 = vmatpush.msra.mxu0 %v395
      %451 = vmatpush.msra.mxu0 %v394
      %452 = vmatmul.f32.gmra.mxu0 %v420
      %v453 = vpop.f32.mrf.mxu0
      %v454 = vadd.f32 0.0, %v453
      %455 = vmatmul.f32.gmra.mxu0 %v422
      %v456 = vpop.f32.mrf.mxu0
      %v457 = vadd.f32 0.0, %v456
      %458 = vmatmul.f32.gmra.mxu0 %v424
      %v459 = vpop.f32.mrf.mxu0
      %v460 = vadd.f32 0.0, %v459
      %461 = vmatmul.f32.gmra.mxu0 %v426
      %v462 = vpop.f32.mrf.mxu0
      %v463 = vadd.f32 0.0, %v462
      %464 = vmatmul.f32.gmra.mxu0 %v428
      %v465 = vpop.f32.mrf.mxu0
      %v466 = vadd.f32 0.0, %v465
      %467 = vmatmul.f32.gmra.mxu0 %v430
      %v468 = vpop.f32.mrf.mxu0
      %v469 = vadd.f32 0.0, %v468
      %470 = vmatmul.f32.gmra.mxu0 %v432
      %v471 = vpop.f32.mrf.mxu0
      %v472 = vadd.f32 0.0, %v471
      %473 = vmatmul.f32.gmra.mxu0 %v434
      %v474 = vpop.f32.mrf.mxu0
      %v475 = vadd.f32 0.0, %v474
      %476 = vdwg.mxu0
      %v477 = vadd.f32 %v370, %v454
      %v478 = vadd.f32 %v373, %v457
      %v479 = vadd.f32 %v376, %v460
      %v480 = vadd.f32 %v379, %v463
      %v481 = vadd.f32 %v382, %v466
      %v482 = vadd.f32 %v385, %v469
      %v483 = vadd.f32 %v388, %v472
      %v484 = vadd.f32 %v391, %v475
      %v485 = vld [vmem:[%s2] sm:$0x1]
      %v487 = vperm.slane %v485, 0
      %v489 = vadd.f32 %v477, %v487
      %v490 = vadd.f32 %v478, %v487
      %v491 = vadd.f32 %v479, %v487
      %v492 = vadd.f32 %v480, %v487
      %v493 = vadd.f32 %v481, %v487
      %v494 = vadd.f32 %v482, %v487
      %v495 = vadd.f32 %v483, %v487
      %v496 = vadd.f32 %v484, %v487
      %vm497 = vcmp.ge.f32.partialorder %v489, 0.0
      %vm498 = vcmp.ge.f32.partialorder %v490, 0.0
      %vm499 = vcmp.ge.f32.partialorder %v491, 0.0
      %vm500 = vcmp.ge.f32.partialorder %v492, 0.0
      %vm501 = vcmp.ge.f32.partialorder %v493, 0.0
      %vm502 = vcmp.ge.f32.partialorder %v494, 0.0
      %vm503 = vcmp.ge.f32.partialorder %v495, 0.0
      %vm504 = vcmp.ge.f32.partialorder %v496, 0.0
      %v505 = vmul.f32 %v489, 0.01
      %v506 = vmul.f32 %v490, 0.01
      %v507 = vmul.f32 %v491, 0.01
      %v508 = vmul.f32 %v492, 0.01
      %v509 = vmul.f32 %v493, 0.01
      %v510 = vmul.f32 %v494, 0.01
      %v511 = vmul.f32 %v495, 0.01
      %v512 = vmul.f32 %v496, 0.01
      %v513 = vsel %vm497, %v489, %v505
      %v514 = vsel %vm498, %v490, %v506
      %v515 = vsel %vm499, %v491, %v507
      %v516 = vsel %vm500, %v492, %v508
      %v517 = vsel %vm501, %v493, %v509
      %v518 = vsel %vm502, %v494, %v510
      %v519 = vsel %vm503, %v495, %v511
      %v520 = vsel %vm504, %v496, %v512
      %v521 = vld [vmem:[%s3] sm:$0xff]
      %v522 = vld [vmem:[%s3 + $0x8] sm:$0xff]
      %v523 = vld [vmem:[%s3 + $0x10] sm:$0xff]
      %v524 = vld [vmem:[%s3 + $0x18] sm:$0xff]
      %v525 = vld [vmem:[%s3 + $0x20] sm:$0xff]
      %v526 = vld [vmem:[%s3 + $0x28] sm:$0xff]
      %v527 = vld [vmem:[%s3 + $0x30] sm:$0xff]
      %v528 = vld [vmem:[%s3 + $0x38] sm:$0xff]
      %v529 = vld [vmem:[%s4] sm:$0x1]
      %v531 = vperm.slane %v529, 0
      %v534 = vsel %vm278, %v513, 0
      %v537 = vsel %vm278, %v514, 0
      %v540 = vsel %vm278, %v515, 0
      %v543 = vsel %vm278, %v516, 0
      %v546 = vsel %vm278, %v517, 0
      %v549 = vsel %vm278, %v518, 0
      %v552 = vsel %vm278, %v519, 0
      %v555 = vsel %vm278, %v520, 0
      %557 = vmatpush.msra.mxu0 0.0
      %558 = vmatpush.msra.mxu0 0.0
      %559 = vmatpush.msra.mxu0 0.0
      %560 = vmatpush.msra.mxu0 0.0
      %561 = vmatpush.msra.mxu0 0.0
      %562 = vmatpush.msra.mxu0 0.0
      %563 = vmatpush.msra.mxu0 0.0
      %564 = vmatpush.msra.mxu0 0.0
      %565 = vmatpush.msra.mxu0 %v528
      %566 = vmatpush.msra.mxu0 %v527
      %567 = vmatpush.msra.mxu0 %v526
      %568 = vmatpush.msra.mxu0 %v525
      %569 = vmatpush.msra.mxu0 %v524
      %570 = vmatpush.msra.mxu0 %v523
      %571 = vmatpush.msra.mxu0 %v522
      %572 = vmatpush.msra.mxu0 %v521
      %573 = vmatmul.f32.gmra.mxu0 %v534
      %v574 = vpop.f32.mrf.mxu0
      %v575 = vadd.f32 %v531, %v574
      %576 = vmatmul.f32.gmra.mxu0 %v537
      %v577 = vpop.f32.mrf.mxu0
      %v578 = vadd.f32 %v531, %v577
      %579 = vmatmul.f32.gmra.mxu0 %v540
      %v580 = vpop.f32.mrf.mxu0
      %v581 = vadd.f32 %v531, %v580
      %582 = vmatmul.f32.gmra.mxu0 %v543
      %v583 = vpop.f32.mrf.mxu0
      %v584 = vadd.f32 %v531, %v583
      %585 = vmatmul.f32.gmra.mxu0 %v546
      %v586 = vpop.f32.mrf.mxu0
      %v587 = vadd.f32 %v531, %v586
      %588 = vmatmul.f32.gmra.mxu0 %v549
      %v589 = vpop.f32.mrf.mxu0
      %v590 = vadd.f32 %v531, %v589
      %591 = vmatmul.f32.gmra.mxu0 %v552
      %v592 = vpop.f32.mrf.mxu0
      %v593 = vadd.f32 %v531, %v592
      %594 = vmatmul.f32.gmra.mxu0 %v555
      %v595 = vpop.f32.mrf.mxu0
      %v596 = vadd.f32 %v531, %v595
      %597 = vdwg.mxu0
      %598 = vst [vmem:[%s224] sm:$0xff] %v575
      %599 = vst [vmem:[%s224 + $0x8] sm:$0xff] %v578
      %600 = vst [vmem:[%s224 + $0x10] sm:$0xff] %v581
      %601 = vst [vmem:[%s224 + $0x18] sm:$0xff] %v584
      %602 = vst [vmem:[%s224 + $0x20] sm:$0xff] %v587
      %603 = vst [vmem:[%s224 + $0x28] sm:$0xff] %v590
      %604 = vst [vmem:[%s224 + $0x30] sm:$0xff] %v593
      %605 = vst [vmem:[%s224 + $0x38] sm:$0xff] %v596
      %p606 = scmp.lt.s32.totalorder %s16, 1
      %s607 = scalar_select %p606, %s16, 1
      %s608 = smul.addr %s607, 8
      %s609 = smul.addr %s608, 8
      %s610 = scalar_lea.vmem %s5, %s609
      // Predicated region
      $region41: #{lstm_head_forward.9} parent=39 // pred_check
        %p611 = pneg %p144
      $region42: #{lstm_head_forward.9} parent=39 // pred_check_branch
        %613 = sbr.rel (%p611) target = $region44
      $region43: #{lstm_head_forward.9} parent=39 // pred_region
        _
      $region44: #{lstm_head_forward.9} parent=39 // pred_fallthru
        _
    $region40: #{lstm_head_forward.9} parent=5 // pred_fallthru
      _
    %p614 = scmp.le.s32.totalorder 2, %s11
    // Predicated region
    $region45: #{lstm_head_forward.9} parent=5 // pred_check
      %p615 = pneg %p614
    $region46: #{lstm_head_forward.9} parent=5 // pred_check_branch
      %617 = sbr.rel (%p615) target = $region48
    $region47: #{lstm_head_forward.9} parent=5 // pred_region
      %s618 = ssub.s32 %s11, 2
      // Predicated region
      $region49: #{lstm_head_forward.9} parent=47 // pred_check
        %p619 = pneg %p150
      $region50: #{lstm_head_forward.9} parent=47 // pred_check_branch
        %621 = sbr.rel (%p619) target = $region52
      $region51: #{lstm_head_forward.9} parent=47 // pred_region
        %p622 = scmp.lt.s32.totalorder %s17, 1
        %s623 = scalar_select %p622, %s17, 1
        %s624 = smul.addr %s623, 8
        %s625 = smul.addr %s624, 8
        %s626 = scalar_lea.vmem %s5, %s625
      $region52: #{lstm_head_forward.9} parent=47 // pred_fallthru
        _
    $region48: #{lstm_head_forward.9} parent=5 // pred_fallthru
      _
  $region6: #{lstm_head_forward.9} parent=0 // loop_footer
    %s15 = sadd.s32 1, %s11
  $region7: #{lstm_head_forward.9} parent=0 // loop_footer_branch
    %10 = sbr.rel target = $region3
  $region8: #{lstm_head_forward.9} parent=0 // loop_exit
    _

</llo_original>
